<compile_context>
chip_gen: v7x
topology: tpu7x:2x2x1
jax: 0.10.0
libtpu: 0.0.40
codegen_flags: <defaults>
</compile_context>

<pallas_src>
import functools
import math

import jax
import jax.numpy as jnp
from jax import lax
from jax.experimental import pallas as pl
from jax.experimental.pallas import tpu as pltpu

KSIZE = 7
PAD = 3
EPS = 1e-6


def _fused_block_kernel(xpad_ref, wdw_ref, bdw_ref, lnw_ref, lnb_ref,
                        w1_ref, b1_ref, w2_ref, b2_ref, g_ref, o_ref,
                        *, TH, W, C):
    """One grid step = one batch image x one strip of TH image rows.

    xpad_ref : (Hp, Wp, C)  padded NHWC image (batch dim squeezed), resident per n
    wdw_ref  : (7, 7, C)    depthwise weights;  vectors passed as (1, d) rows
    o_ref    : (C, TM)      channels-first output strip, TM = TH * W
    """
    TM = TH * W
    j = pl.program_id(1)
    h0 = j * TH                       # first padded row of this strip's halo window
    f32 = jnp.float32

    # ---- 7x7 depthwise conv on a (TH+6, W, C) window ------------------------------
    # 7 sublane-shifted kw windows, each reused across the 7 (cheap) kh offsets.
    acc = jnp.zeros((TH, W, C), f32)
    for kw in range(KSIZE):
        xw = xpad_ref[pl.ds(h0, TH + KSIZE - 1), kw:kw + W, :].astype(f32)   # (TH+6, W, C)
        for kh in range(KSIZE):
            acc = acc + xw[kh:kh + TH] * wdw_ref[kh, kw, :].astype(f32)
    y = acc.reshape(TM, C) + bdw_ref[0].astype(f32)

    # residual = un-padded input rows of this strip (center crop of the halo window)
    res = xpad_ref[pl.ds(h0 + PAD, TH), PAD:PAD + W, :].astype(f32).reshape(TM, C)

    # ---- LayerNorm over channels (channels_last, biased variance, eps=1e-6) -------
    mean = jnp.mean(y, axis=-1, keepdims=True)
    d = y - mean
    var = jnp.mean(d * d, axis=-1, keepdims=True)
    xln = d * lax.rsqrt(var + EPS) * lnw_ref[0].astype(f32) + lnb_ref[0].astype(f32)

    # ---- MLP: Linear -> exact GELU -> Linear -> layer-scale -> residual -----------
    # TODO(synk): bf16 matmul inputs (f32 accumulate) would better use the MXU on
    # v5e/v6e/v7x but deviates from the module's f32 forward semantics; kept in f32.
    h = jnp.dot(xln, w1_ref[...].astype(f32),
                preferred_element_type=f32) + b1_ref[0].astype(f32)
    h = 0.5 * h * (1.0 + lax.erf(h * (1.0 / math.sqrt(2.0))))   # exact GELU (nn.GELU default)
    z = jnp.dot(h, w2_ref[...].astype(f32),
                preferred_element_type=f32) + b2_ref[0].astype(f32)
    out = res + z * g_ref[0].astype(f32)                        # drop_path(0.0) = identity

    # store channels-first so the wrapper's final NCHW reshape is free
    o_ref[...] = jnp.transpose(out).astype(o_ref.dtype)         # (C, TM)


def _choose_row_strip(H, W):
    """Pick TH (image rows per grid step): a divisor of H (no dropped remainder),
    ~<=512 flattened rows per strip, preferring TH*W % 128 == 0 (lane-dense stores)."""
    target = max(1, 512 // max(W, 1))
    divisors = [d for d in range(1, H + 1) if H % d == 0 and d <= target]
    if not divisors:
        return H
    lane_dense = [d for d in divisors if (d * W) % 128 == 0]
    return max(lane_dense) if lane_dense else max(divisors)


def convnext_block(x_nchw, params):
    (w_dw, b_dw, lnw, lnb, w1, b1, w2, b2, gamma) = params
    N, C, H, W = x_nchw.shape
    Hp, Wp = H + 2 * PAD, W + 2 * PAD

    # TODO(synk): the NCHW->NHWC transpose + 3px pad is still one (fused) XLA prep pass;
    # folding it into the kernel needs an in-kernel C<->HW transpose of the input tile.
    x_nhwc = jnp.transpose(x_nchw, (0, 2, 3, 1))
    xpad = jnp.pad(x_nhwc, ((0, 0), (PAD, PAD), (PAD, PAD), (0, 0)))

    TH = _choose_row_strip(H, W)
    J = H // TH
    TM = TH * W
    kern = functools.partial(_fused_block_kernel, TH=TH, W=W, C=C)

    out_cfirst = pl.pallas_call(
        kern,
        out_shape=jax.ShapeDtypeStruct((N, C, H * W), x_nchw.dtype),
        grid_spec=pltpu.PrefetchScalarGridSpec(
            num_scalar_prefetch=0,
            grid=(N, J),
            in_specs=[
                pl.BlockSpec((None, Hp, Wp, C), lambda n, j: (n, 0, 0, 0)),   # padded image (resident per n)
                pl.BlockSpec((KSIZE, KSIZE, C), lambda n, j: (0, 0, 0)),      # dwconv weight
                pl.BlockSpec((1, C), lambda n, j: (0, 0)),                    # dwconv bias
                pl.BlockSpec((1, C), lambda n, j: (0, 0)),                    # ln weight
                pl.BlockSpec((1, C), lambda n, j: (0, 0)),                    # ln bias
                pl.BlockSpec((C, 4 * C), lambda n, j: (0, 0)),                # pwconv1 weight
                pl.BlockSpec((1, 4 * C), lambda n, j: (0, 0)),                # pwconv1 bias
                pl.BlockSpec((4 * C, C), lambda n, j: (0, 0)),                # pwconv2 weight
                pl.BlockSpec((1, C), lambda n, j: (0, 0)),                    # pwconv2 bias
                pl.BlockSpec((1, C), lambda n, j: (0, 0)),                    # gamma
            ],
            out_specs=pl.BlockSpec((None, C, TM), lambda n, j: (n, 0, j)),
        ),
        compiler_params=pltpu.CompilerParams(
            dimension_semantics=("parallel", "parallel")),
    )(xpad, w_dw, b_dw.reshape(1, C), lnw.reshape(1, C), lnb.reshape(1, C),
      w1, b1.reshape(1, 4 * C), w2, b2.reshape(1, C), gamma.reshape(1, C))

    return out_cfirst.reshape(N, C, H, W)


def reference_block(x_nchw, params):
    """Pure-JAX reference with identical semantics (for correctness check)."""
    (w_dw, b_dw, lnw, lnb, w1, b1, w2, b2, gamma) = params
    N, C, H, W = x_nchw.shape
    x = jnp.transpose(x_nchw, (0, 2, 3, 1))
    w_hwio = w_dw[:, :, None, :]                              # (7,7,1,C), groups=C
    y = lax.conv_general_dilated(
        x, w_hwio, window_strides=(1, 1), padding=[(PAD, PAD), (PAD, PAD)],
        dimension_numbers=("NHWC", "HWIO", "NHWC"), feature_group_count=C) + b_dw
    mean = y.mean(-1, keepdims=True)
    var = ((y - mean) ** 2).mean(-1, keepdims=True)
    yn = (y - mean) / jnp.sqrt(var + EPS) * lnw + lnb
    h = yn @ w1 + b1
    h = 0.5 * h * (1.0 + lax.erf(h / jnp.sqrt(2.0)))
    z = (h @ w2 + b2) * gamma
    out = x + z
    return jnp.transpose(out, (0, 3, 1, 2))


if __name__ == "__main__":
    dim = 32
    N, H, W = 2, 8, 8
    key = jax.random.PRNGKey(0)
    ks = jax.random.split(key, 8)

    # deterministic parameter init (shapes from Block.__init__, torch layouts transposed
    # to math-friendly layouts: dwconv (7,7,C), pwconv1 (C,4C), pwconv2 (4C,C))
    w_dw = jax.random.normal(ks[0], (KSIZE, KSIZE, dim), jnp.float32) * 0.1
    b_dw = jax.random.normal(ks[1], (dim,), jnp.float32) * 0.1
    lnw = jnp.ones((dim,), jnp.float32)
    lnb = jnp.zeros((dim,), jnp.float32)
    w1 = jax.random.normal(ks[2], (dim, 4 * dim), jnp.float32) * 0.1
    b1 = jax.random.normal(ks[3], (4 * dim,), jnp.float32) * 0.1
    w2 = jax.random.normal(ks[4], (4 * dim, dim), jnp.float32) * 0.1
    b2 = jax.random.normal(ks[5], (dim,), jnp.float32) * 0.1
    gamma = jax.random.normal(ks[7], (dim,), jnp.float32) * 0.1   # learned layer-scale param
    params = (w_dw, b_dw, lnw, lnb, w1, b1, w2, b2, gamma)

    x = jax.random.normal(ks[6], (N, dim, H, W), jnp.float32)     # NCHW, like PyTorch

    out = jax.block_until_ready(convnext_block(x, params))
    ref = jax.block_until_ready(reference_block(x, params))

    assert out.shape == x.shape and out.dtype == x.dtype
    assert jnp.allclose(out, ref, rtol=1e-5, atol=1e-5), \
        f"max abs err {jnp.max(jnp.abs(out - ref))}"
    print("KERNEL_OK")
</pallas_src>

<mosaic_0001>
module attributes {stable_mosaic.version = 11 : i64} {
  func.func @_fused_block_kernel(%arg0: i32, %arg1: i32, %arg2: memref<1x14x14x32xf32, #tpu.memory_space<vmem>>, %arg3: memref<7x7x32xf32, #tpu.memory_space<vmem>>, %arg4: memref<1x32xf32, #tpu.memory_space<vmem>>, %arg5: memref<1x32xf32, #tpu.memory_space<vmem>>, %arg6: memref<1x32xf32, #tpu.memory_space<vmem>>, %arg7: memref<32x128xf32, #tpu.memory_space<vmem>>, %arg8: memref<1x128xf32, #tpu.memory_space<vmem>>, %arg9: memref<128x32xf32, #tpu.memory_space<vmem>>, %arg10: memref<1x32xf32, #tpu.memory_space<vmem>>, %arg11: memref<1x32xf32, #tpu.memory_space<vmem>>, %arg12: memref<1x32x64xf32, #tpu.memory_space<vmem>>) attributes {dimension_semantics = [#tpu.dimension_semantics<parallel>, #tpu.dimension_semantics<parallel>], iteration_bounds = array<i64: 2, 1>, scalar_prefetch = 0 : i64, scratch_operands = 0 : i64, tpu.core_type = #tpu.core_type<tc>, window_params = [{transform_indices = @transform_0, window_bounds = array<i64: 1, 14, 14, 32>}, {pipeline_mode = #tpu.pipeline_mode<synchronous>, transform_indices = @transform_1, window_bounds = array<i64: 7, 7, 32>}, {pipeline_mode = #tpu.pipeline_mode<synchronous>, transform_indices = @transform_2, window_bounds = array<i64: 1, 32>}, {pipeline_mode = #tpu.pipeline_mode<synchronous>, transform_indices = @transform_3, window_bounds = array<i64: 1, 32>}, {pipeline_mode = #tpu.pipeline_mode<synchronous>, transform_indices = @transform_4, window_bounds = array<i64: 1, 32>}, {pipeline_mode = #tpu.pipeline_mode<synchronous>, transform_indices = @transform_5, window_bounds = array<i64: 32, 128>}, {pipeline_mode = #tpu.pipeline_mode<synchronous>, transform_indices = @transform_6, window_bounds = array<i64: 1, 128>}, {pipeline_mode = #tpu.pipeline_mode<synchronous>, transform_indices = @transform_7, window_bounds = array<i64: 128, 32>}, {pipeline_mode = #tpu.pipeline_mode<synchronous>, transform_indices = @transform_8, window_bounds = array<i64: 1, 32>}, {pipeline_mode = #tpu.pipeline_mode<synchronous>, transform_indices = @transform_9, window_bounds = array<i64: 1, 32>}, {transform_indices = @transform_10, window_bounds = array<i64: 1, 32, 64>}]} {
    %c8_i32 = arith.constant 8 : i32
    %0 = arith.muli %arg1, %c8_i32 : i32
    %cst = arith.constant 0.000000e+00 : f32
    %1 = vector.broadcast %cst : f32 to vector<8x8x32xf32>
    %c0 = arith.constant 0 : index
    %2 = arith.index_cast %0 : i32 to index
    %c0_0 = arith.constant 0 : index
    %c0_1 = arith.constant 0 : index
    %3 = vector.load %arg2[%c0, %2, %c0_0, %c0_1] : memref<1x14x14x32xf32, #tpu.memory_space<vmem>>, vector<1x14x8x32xf32>
    %4 = vector.shape_cast %3 : vector<1x14x8x32xf32> to vector<14x8x32xf32>
    %5 = vector.extract_strided_slice %4 {offsets = [0, 0, 0], sizes = [8, 8, 32], strides = [1, 1, 1]} : vector<14x8x32xf32> to vector<8x8x32xf32>
    %c0_2 = arith.constant 0 : index
    %c0_3 = arith.constant 0 : index
    %c0_4 = arith.constant 0 : index
    %6 = vector.load %arg3[%c0_2, %c0_3, %c0_4] : memref<7x7x32xf32, #tpu.memory_space<vmem>>, vector<1x1x32xf32>
    %7 = vector.shape_cast %6 : vector<1x1x32xf32> to vector<32xf32>
    %8 = vector.shape_cast %7 : vector<32xf32> to vector<1x1x32xf32>
    %9 = vector.broadcast %8 : vector<1x1x32xf32> to vector<8x8x32xf32>
    %10 = arith.mulf %5, %9 : vector<8x8x32xf32>
    %11 = arith.addf %1, %10 : vector<8x8x32xf32>
    %12 = vector.extract_strided_slice %4 {offsets = [1, 0, 0], sizes = [8, 8, 32], strides = [1, 1, 1]} : vector<14x8x32xf32> to vector<8x8x32xf32>
    %c1 = arith.constant 1 : index
    %c0_5 = arith.constant 0 : index
    %c0_6 = arith.constant 0 : index
    %13 = vector.load %arg3[%c1, %c0_5, %c0_6] : memref<7x7x32xf32, #tpu.memory_space<vmem>>, vector<1x1x32xf32>
    %14 = vector.shape_cast %13 : vector<1x1x32xf32> to vector<32xf32>
    %15 = vector.shape_cast %14 : vector<32xf32> to vector<1x1x32xf32>
    %16 = vector.broadcast %15 : vector<1x1x32xf32> to vector<8x8x32xf32>
    %17 = arith.mulf %12, %16 : vector<8x8x32xf32>
    %18 = arith.addf %11, %17 : vector<8x8x32xf32>
    %19 = vector.extract_strided_slice %4 {offsets = [2, 0, 0], sizes = [8, 8, 32], strides = [1, 1, 1]} : vector<14x8x32xf32> to vector<8x8x32xf32>
    %c2 = arith.constant 2 : index
    %c0_7 = arith.constant 0 : index
    %c0_8 = arith.constant 0 : index
    %20 = vector.load %arg3[%c2, %c0_7, %c0_8] : memref<7x7x32xf32, #tpu.memory_space<vmem>>, vector<1x1x32xf32>
    %21 = vector.shape_cast %20 : vector<1x1x32xf32> to vector<32xf32>
    %22 = vector.shape_cast %21 : vector<32xf32> to vector<1x1x32xf32>
    %23 = vector.broadcast %22 : vector<1x1x32xf32> to vector<8x8x32xf32>
    %24 = arith.mulf %19, %23 : vector<8x8x32xf32>
    %25 = arith.addf %18, %24 : vector<8x8x32xf32>
    %26 = vector.extract_strided_slice %4 {offsets = [3, 0, 0], sizes = [8, 8, 32], strides = [1, 1, 1]} : vector<14x8x32xf32> to vector<8x8x32xf32>
    %c3 = arith.constant 3 : index
    %c0_9 = arith.constant 0 : index
    %c0_10 = arith.constant 0 : index
    %27 = vector.load %arg3[%c3, %c0_9, %c0_10] : memref<7x7x32xf32, #tpu.memory_space<vmem>>, vector<1x1x32xf32>
    %28 = vector.shape_cast %27 : vector<1x1x32xf32> to vector<32xf32>
    %29 = vector.shape_cast %28 : vector<32xf32> to vector<1x1x32xf32>
    %30 = vector.broadcast %29 : vector<1x1x32xf32> to vector<8x8x32xf32>
    %31 = arith.mulf %26, %30 : vector<8x8x32xf32>
    %32 = arith.addf %25, %31 : vector<8x8x32xf32>
    %33 = vector.extract_strided_slice %4 {offsets = [4, 0, 0], sizes = [8, 8, 32], strides = [1, 1, 1]} : vector<14x8x32xf32> to vector<8x8x32xf32>
    %c4 = arith.constant 4 : index
    %c0_11 = arith.constant 0 : index
    %c0_12 = arith.constant 0 : index
    %34 = vector.load %arg3[%c4, %c0_11, %c0_12] : memref<7x7x32xf32, #tpu.memory_space<vmem>>, vector<1x1x32xf32>
    %35 = vector.shape_cast %34 : vector<1x1x32xf32> to vector<32xf32>
    %36 = vector.shape_cast %35 : vector<32xf32> to vector<1x1x32xf32>
    %37 = vector.broadcast %36 : vector<1x1x32xf32> to vector<8x8x32xf32>
    %38 = arith.mulf %33, %37 : vector<8x8x32xf32>
    %39 = arith.addf %32, %38 : vector<8x8x32xf32>
    %40 = vector.extract_strided_slice %4 {offsets = [5, 0, 0], sizes = [8, 8, 32], strides = [1, 1, 1]} : vector<14x8x32xf32> to vector<8x8x32xf32>
    %c5 = arith.constant 5 : index
    %c0_13 = arith.constant 0 : index
    %c0_14 = arith.constant 0 : index
    %41 = vector.load %arg3[%c5, %c0_13, %c0_14] : memref<7x7x32xf32, #tpu.memory_space<vmem>>, vector<1x1x32xf32>
    %42 = vector.shape_cast %41 : vector<1x1x32xf32> to vector<32xf32>
    %43 = vector.shape_cast %42 : vector<32xf32> to vector<1x1x32xf32>
    %44 = vector.broadcast %43 : vector<1x1x32xf32> to vector<8x8x32xf32>
    %45 = arith.mulf %40, %44 : vector<8x8x32xf32>
    %46 = arith.addf %39, %45 : vector<8x8x32xf32>
    %47 = vector.extract_strided_slice %4 {offsets = [6, 0, 0], sizes = [8, 8, 32], strides = [1, 1, 1]} : vector<14x8x32xf32> to vector<8x8x32xf32>
    %c6 = arith.constant 6 : index
    %c0_15 = arith.constant 0 : index
    %c0_16 = arith.constant 0 : index
    %48 = vector.load %arg3[%c6, %c0_15, %c0_16] : memref<7x7x32xf32, #tpu.memory_space<vmem>>, vector<1x1x32xf32>
    %49 = vector.shape_cast %48 : vector<1x1x32xf32> to vector<32xf32>
    %50 = vector.shape_cast %49 : vector<32xf32> to vector<1x1x32xf32>
    %51 = vector.broadcast %50 : vector<1x1x32xf32> to vector<8x8x32xf32>
    %52 = arith.mulf %47, %51 : vector<8x8x32xf32>
    %53 = arith.addf %46, %52 : vector<8x8x32xf32>
    %c0_17 = arith.constant 0 : index
    %54 = arith.index_cast %0 : i32 to index
    %c1_18 = arith.constant 1 : index
    %c0_19 = arith.constant 0 : index
    %55 = vector.load %arg2[%c0_17, %54, %c1_18, %c0_19] : memref<1x14x14x32xf32, #tpu.memory_space<vmem>>, vector<1x14x8x32xf32>
    %56 = vector.shape_cast %55 : vector<1x14x8x32xf32> to vector<14x8x32xf32>
    %57 = vector.extract_strided_slice %56 {offsets = [0, 0, 0], sizes = [8, 8, 32], strides = [1, 1, 1]} : vector<14x8x32xf32> to vector<8x8x32xf32>
    %c0_20 = arith.constant 0 : index
    %c1_21 = arith.constant 1 : index
    %c0_22 = arith.constant 0 : index
    %58 = vector.load %arg3[%c0_20, %c1_21, %c0_22] : memref<7x7x32xf32, #tpu.memory_space<vmem>>, vector<1x1x32xf32>
    %59 = vector.shape_cast %58 : vector<1x1x32xf32> to vector<32xf32>
    %60 = vector.shape_cast %59 : vector<32xf32> to vector<1x1x32xf32>
    %61 = vector.broadcast %60 : vector<1x1x32xf32> to vector<8x8x32xf32>
    %62 = arith.mulf %57, %61 : vector<8x8x32xf32>
    %63 = arith.addf %53, %62 : vector<8x8x32xf32>
    %64 = vector.extract_strided_slice %56 {offsets = [1, 0, 0], sizes = [8, 8, 32], strides = [1, 1, 1]} : vector<14x8x32xf32> to vector<8x8x32xf32>
    %c1_23 = arith.constant 1 : index
    %c1_24 = arith.constant 1 : index
    %c0_25 = arith.constant 0 : index
    %65 = vector.load %arg3[%c1_23, %c1_24, %c0_25] : memref<7x7x32xf32, #tpu.memory_space<vmem>>, vector<1x1x32xf32>
    %66 = vector.shape_cast %65 : vector<1x1x32xf32> to vector<32xf32>
    %67 = vector.shape_cast %66 : vector<32xf32> to vector<1x1x32xf32>
    %68 = vector.broadcast %67 : vector<1x1x32xf32> to vector<8x8x32xf32>
    %69 = arith.mulf %64, %68 : vector<8x8x32xf32>
    %70 = arith.addf %63, %69 : vector<8x8x32xf32>
    %71 = vector.extract_strided_slice %56 {offsets = [2, 0, 0], sizes = [8, 8, 32], strides = [1, 1, 1]} : vector<14x8x32xf32> to vector<8x8x32xf32>
    %c2_26 = arith.constant 2 : index
    %c1_27 = arith.constant 1 : index
    %c0_28 = arith.constant 0 : index
    %72 = vector.load %arg3[%c2_26, %c1_27, %c0_28] : memref<7x7x32xf32, #tpu.memory_space<vmem>>, vector<1x1x32xf32>
    %73 = vector.shape_cast %72 : vector<1x1x32xf32> to vector<32xf32>
    %74 = vector.shape_cast %73 : vector<32xf32> to vector<1x1x32xf32>
    %75 = vector.broadcast %74 : vector<1x1x32xf32> to vector<8x8x32xf32>
    %76 = arith.mulf %71, %75 : vector<8x8x32xf32>
    %77 = arith.addf %70, %76 : vector<8x8x32xf32>
    %78 = vector.extract_strided_slice %56 {offsets = [3, 0, 0], sizes = [8, 8, 32], strides = [1, 1, 1]} : vector<14x8x32xf32> to vector<8x8x32xf32>
    %c3_29 = arith.constant 3 : index
    %c1_30 = arith.constant 1 : index
    %c0_31 = arith.constant 0 : index
    %79 = vector.load %arg3[%c3_29, %c1_30, %c0_31] : memref<7x7x32xf32, #tpu.memory_space<vmem>>, vector<1x1x32xf32>
    %80 = vector.shape_cast %79 : vector<1x1x32xf32> to vector<32xf32>
    %81 = vector.shape_cast %80 : vector<32xf32> to vector<1x1x32xf32>
    %82 = vector.broadcast %81 : vector<1x1x32xf32> to vector<8x8x32xf32>
    %83 = arith.mulf %78, %82 : vector<8x8x32xf32>
    %84 = arith.addf %77, %83 : vector<8x8x32xf32>
    %85 = vector.extract_strided_slice %56 {offsets = [4, 0, 0], sizes = [8, 8, 32], strides = [1, 1, 1]} : vector<14x8x32xf32> to vector<8x8x32xf32>
    %c4_32 = arith.constant 4 : index
    %c1_33 = arith.constant 1 : index
    %c0_34 = arith.constant 0 : index
    %86 = vector.load %arg3[%c4_32, %c1_33, %c0_34] : memref<7x7x32xf32, #tpu.memory_space<vmem>>, vector<1x1x32xf32>
    %87 = vector.shape_cast %86 : vector<1x1x32xf32> to vector<32xf32>
    %88 = vector.shape_cast %87 : vector<32xf32> to vector<1x1x32xf32>
    %89 = vector.broadcast %88 : vector<1x1x32xf32> to vector<8x8x32xf32>
    %90 = arith.mulf %85, %89 : vector<8x8x32xf32>
    %91 = arith.addf %84, %90 : vector<8x8x32xf32>
    %92 = vector.extract_strided_slice %56 {offsets = [5, 0, 0], sizes = [8, 8, 32], strides = [1, 1, 1]} : vector<14x8x32xf32> to vector<8x8x32xf32>
    %c5_35 = arith.constant 5 : index
    %c1_36 = arith.constant 1 : index
    %c0_37 = arith.constant 0 : index
    %93 = vector.load %arg3[%c5_35, %c1_36, %c0_37] : memref<7x7x32xf32, #tpu.memory_space<vmem>>, vector<1x1x32xf32>
    %94 = vector.shape_cast %93 : vector<1x1x32xf32> to vector<32xf32>
    %95 = vector.shape_cast %94 : vector<32xf32> to vector<1x1x32xf32>
    %96 = vector.broadcast %95 : vector<1x1x32xf32> to vector<8x8x32xf32>
    %97 = arith.mulf %92, %96 : vector<8x8x32xf32>
    %98 = arith.addf %91, %97 : vector<8x8x32xf32>
    %99 = vector.extract_strided_slice %56 {offsets = [6, 0, 0], sizes = [8, 8, 32], strides = [1, 1, 1]} : vector<14x8x32xf32> to vector<8x8x32xf32>
    %c6_38 = arith.constant 6 : index
    %c1_39 = arith.constant 1 : index
    %c0_40 = arith.constant 0 : index
    %100 = vector.load %arg3[%c6_38, %c1_39, %c0_40] : memref<7x7x32xf32, #tpu.memory_space<vmem>>, vector<1x1x32xf32>
    %101 = vector.shape_cast %100 : vector<1x1x32xf32> to vector<32xf32>
    %102 = vector.shape_cast %101 : vector<32xf32> to vector<1x1x32xf32>
    %103 = vector.broadcast %102 : vector<1x1x32xf32> to vector<8x8x32xf32>
    %104 = arith.mulf %99, %103 : vector<8x8x32xf32>
    %105 = arith.addf %98, %104 : vector<8x8x32xf32>
    %c0_41 = arith.constant 0 : index
    %106 = arith.index_cast %0 : i32 to index
    %c2_42 = arith.constant 2 : index
    %c0_43 = arith.constant 0 : index
    %107 = vector.load %arg2[%c0_41, %106, %c2_42, %c0_43] : memref<1x14x14x32xf32, #tpu.memory_space<vmem>>, vector<1x14x8x32xf32>
    %108 = vector.shape_cast %107 : vector<1x14x8x32xf32> to vector<14x8x32xf32>
    %109 = vector.extract_strided_slice %108 {offsets = [0, 0, 0], sizes = [8, 8, 32], strides = [1, 1, 1]} : vector<14x8x32xf32> to vector<8x8x32xf32>
    %c0_44 = arith.constant 0 : index
    %c2_45 = arith.constant 2 : index
    %c0_46 = arith.constant 0 : index
    %110 = vector.load %arg3[%c0_44, %c2_45, %c0_46] : memref<7x7x32xf32, #tpu.memory_space<vmem>>, vector<1x1x32xf32>
    %111 = vector.shape_cast %110 : vector<1x1x32xf32> to vector<32xf32>
    %112 = vector.shape_cast %111 : vector<32xf32> to vector<1x1x32xf32>
    %113 = vector.broadcast %112 : vector<1x1x32xf32> to vector<8x8x32xf32>
    %114 = arith.mulf %109, %113 : vector<8x8x32xf32>
    %115 = arith.addf %105, %114 : vector<8x8x32xf32>
    %116 = vector.extract_strided_slice %108 {offsets = [1, 0, 0], sizes = [8, 8, 32], strides = [1, 1, 1]} : vector<14x8x32xf32> to vector<8x8x32xf32>
    %c1_47 = arith.constant 1 : index
    %c2_48 = arith.constant 2 : index
    %c0_49 = arith.constant 0 : index
    %117 = vector.load %arg3[%c1_47, %c2_48, %c0_49] : memref<7x7x32xf32, #tpu.memory_space<vmem>>, vector<1x1x32xf32>
    %118 = vector.shape_cast %117 : vector<1x1x32xf32> to vector<32xf32>
    %119 = vector.shape_cast %118 : vector<32xf32> to vector<1x1x32xf32>
    %120 = vector.broadcast %119 : vector<1x1x32xf32> to vector<8x8x32xf32>
    %121 = arith.mulf %116, %120 : vector<8x8x32xf32>
    %122 = arith.addf %115, %121 : vector<8x8x32xf32>
    %123 = vector.extract_strided_slice %108 {offsets = [2, 0, 0], sizes = [8, 8, 32], strides = [1, 1, 1]} : vector<14x8x32xf32> to vector<8x8x32xf32>
    %c2_50 = arith.constant 2 : index
    %c2_51 = arith.constant 2 : index
    %c0_52 = arith.constant 0 : index
    %124 = vector.load %arg3[%c2_50, %c2_51, %c0_52] : memref<7x7x32xf32, #tpu.memory_space<vmem>>, vector<1x1x32xf32>
    %125 = vector.shape_cast %124 : vector<1x1x32xf32> to vector<32xf32>
    %126 = vector.shape_cast %125 : vector<32xf32> to vector<1x1x32xf32>
    %127 = vector.broadcast %126 : vector<1x1x32xf32> to vector<8x8x32xf32>
    %128 = arith.mulf %123, %127 : vector<8x8x32xf32>
    %129 = arith.addf %122, %128 : vector<8x8x32xf32>
    %130 = vector.extract_strided_slice %108 {offsets = [3, 0, 0], sizes = [8, 8, 32], strides = [1, 1, 1]} : vector<14x8x32xf32> to vector<8x8x32xf32>
    %c3_53 = arith.constant 3 : index
    %c2_54 = arith.constant 2 : index
    %c0_55 = arith.constant 0 : index
    %131 = vector.load %arg3[%c3_53, %c2_54, %c0_55] : memref<7x7x32xf32, #tpu.memory_space<vmem>>, vector<1x1x32xf32>
    %132 = vector.shape_cast %131 : vector<1x1x32xf32> to vector<32xf32>
    %133 = vector.shape_cast %132 : vector<32xf32> to vector<1x1x32xf32>
    %134 = vector.broadcast %133 : vector<1x1x32xf32> to vector<8x8x32xf32>
    %135 = arith.mulf %130, %134 : vector<8x8x32xf32>
    %136 = arith.addf %129, %135 : vector<8x8x32xf32>
    %137 = vector.extract_strided_slice %108 {offsets = [4, 0, 0], sizes = [8, 8, 32], strides = [1, 1, 1]} : vector<14x8x32xf32> to vector<8x8x32xf32>
    %c4_56 = arith.constant 4 : index
    %c2_57 = arith.constant 2 : index
    %c0_58 = arith.constant 0 : index
    %138 = vector.load %arg3[%c4_56, %c2_57, %c0_58] : memref<7x7x32xf32, #tpu.memory_space<vmem>>, vector<1x1x32xf32>
    %139 = vector.shape_cast %138 : vector<1x1x32xf32> to vector<32xf32>
    %140 = vector.shape_cast %139 : vector<32xf32> to vector<1x1x32xf32>
    %141 = vector.broadcast %140 : vector<1x1x32xf32> to vector<8x8x32xf32>
    %142 = arith.mulf %137, %141 : vector<8x8x32xf32>
    %143 = arith.addf %136, %142 : vector<8x8x32xf32>
    %144 = vector.extract_strided_slice %108 {offsets = [5, 0, 0], sizes = [8, 8, 32], strides = [1, 1, 1]} : vector<14x8x32xf32> to vector<8x8x32xf32>
    %c5_59 = arith.constant 5 : index
    %c2_60 = arith.constant 2 : index
    %c0_61 = arith.constant 0 : index
    %145 = vector.load %arg3[%c5_59, %c2_60, %c0_61] : memref<7x7x32xf32, #tpu.memory_space<vmem>>, vector<1x1x32xf32>
    %146 = vector.shape_cast %145 : vector<1x1x32xf32> to vector<32xf32>
    %147 = vector.shape_cast %146 : vector<32xf32> to vector<1x1x32xf32>
    %148 = vector.broadcast %147 : vector<1x1x32xf32> to vector<8x8x32xf32>
    %149 = arith.mulf %144, %148 : vector<8x8x32xf32>
    %150 = arith.addf %143, %149 : vector<8x8x32xf32>
    %151 = vector.extract_strided_slice %108 {offsets = [6, 0, 0], sizes = [8, 8, 32], strides = [1, 1, 1]} : vector<14x8x32xf32> to vector<8x8x32xf32>
    %c6_62 = arith.constant 6 : index
    %c2_63 = arith.constant 2 : index
    %c0_64 = arith.constant 0 : index
    %152 = vector.load %arg3[%c6_62, %c2_63, %c0_64] : memref<7x7x32xf32, #tpu.memory_space<vmem>>, vector<1x1x32xf32>
    %153 = vector.shape_cast %152 : vector<1x1x32xf32> to vector<32xf32>
    %154 = vector.shape_cast %153 : vector<32xf32> to vector<1x1x32xf32>
    %155 = vector.broadcast %154 : vector<1x1x32xf32> to vector<8x8x32xf32>
    %156 = arith.mulf %151, %155 : vector<8x8x32xf32>
    %157 = arith.addf %150, %156 : vector<8x8x32xf32>
    %c0_65 = arith.constant 0 : index
    %158 = arith.index_cast %0 : i32 to index
    %c3_66 = arith.constant 3 : index
    %c0_67 = arith.constant 0 : index
    %159 = vector.load %arg2[%c0_65, %158, %c3_66, %c0_67] : memref<1x14x14x32xf32, #tpu.memory_space<vmem>>, vector<1x14x8x32xf32>
    %160 = vector.shape_cast %159 : vector<1x14x8x32xf32> to vector<14x8x32xf32>
    %161 = vector.extract_strided_slice %160 {offsets = [0, 0, 0], sizes = [8, 8, 32], strides = [1, 1, 1]} : vector<14x8x32xf32> to vector<8x8x32xf32>
    %c0_68 = arith.constant 0 : index
    %c3_69 = arith.constant 3 : index
    %c0_70 = arith.constant 0 : index
    %162 = vector.load %arg3[%c0_68, %c3_69, %c0_70] : memref<7x7x32xf32, #tpu.memory_space<vmem>>, vector<1x1x32xf32>
    %163 = vector.shape_cast %162 : vector<1x1x32xf32> to vector<32xf32>
    %164 = vector.shape_cast %163 : vector<32xf32> to vector<1x1x32xf32>
    %165 = vector.broadcast %164 : vector<1x1x32xf32> to vector<8x8x32xf32>
    %166 = arith.mulf %161, %165 : vector<8x8x32xf32>
    %167 = arith.addf %157, %166 : vector<8x8x32xf32>
    %168 = vector.extract_strided_slice %160 {offsets = [1, 0, 0], sizes = [8, 8, 32], strides = [1, 1, 1]} : vector<14x8x32xf32> to vector<8x8x32xf32>
    %c1_71 = arith.constant 1 : index
    %c3_72 = arith.constant 3 : index
    %c0_73 = arith.constant 0 : index
    %169 = vector.load %arg3[%c1_71, %c3_72, %c0_73] : memref<7x7x32xf32, #tpu.memory_space<vmem>>, vector<1x1x32xf32>
    %170 = vector.shape_cast %169 : vector<1x1x32xf32> to vector<32xf32>
    %171 = vector.shape_cast %170 : vector<32xf32> to vector<1x1x32xf32>
    %172 = vector.broadcast %171 : vector<1x1x32xf32> to vector<8x8x32xf32>
    %173 = arith.mulf %168, %172 : vector<8x8x32xf32>
    %174 = arith.addf %167, %173 : vector<8x8x32xf32>
    %175 = vector.extract_strided_slice %160 {offsets = [2, 0, 0], sizes = [8, 8, 32], strides = [1, 1, 1]} : vector<14x8x32xf32> to vector<8x8x32xf32>
    %c2_74 = arith.constant 2 : index
    %c3_75 = arith.constant 3 : index
    %c0_76 = arith.constant 0 : index
    %176 = vector.load %arg3[%c2_74, %c3_75, %c0_76] : memref<7x7x32xf32, #tpu.memory_space<vmem>>, vector<1x1x32xf32>
    %177 = vector.shape_cast %176 : vector<1x1x32xf32> to vector<32xf32>
    %178 = vector.shape_cast %177 : vector<32xf32> to vector<1x1x32xf32>
    %179 = vector.broadcast %178 : vector<1x1x32xf32> to vector<8x8x32xf32>
    %180 = arith.mulf %175, %179 : vector<8x8x32xf32>
    %181 = arith.addf %174, %180 : vector<8x8x32xf32>
    %182 = vector.extract_strided_slice %160 {offsets = [3, 0, 0], sizes = [8, 8, 32], strides = [1, 1, 1]} : vector<14x8x32xf32> to vector<8x8x32xf32>
    %c3_77 = arith.constant 3 : index
    %c3_78 = arith.constant 3 : index
    %c0_79 = arith.constant 0 : index
    %183 = vector.load %arg3[%c3_77, %c3_78, %c0_79] : memref<7x7x32xf32, #tpu.memory_space<vmem>>, vector<1x1x32xf32>
    %184 = vector.shape_cast %183 : vector<1x1x32xf32> to vector<32xf32>
    %185 = vector.shape_cast %184 : vector<32xf32> to vector<1x1x32xf32>
    %186 = vector.broadcast %185 : vector<1x1x32xf32> to vector<8x8x32xf32>
    %187 = arith.mulf %182, %186 : vector<8x8x32xf32>
    %188 = arith.addf %181, %187 : vector<8x8x32xf32>
    %189 = vector.extract_strided_slice %160 {offsets = [4, 0, 0], sizes = [8, 8, 32], strides = [1, 1, 1]} : vector<14x8x32xf32> to vector<8x8x32xf32>
    %c4_80 = arith.constant 4 : index
    %c3_81 = arith.constant 3 : index
    %c0_82 = arith.constant 0 : index
    %190 = vector.load %arg3[%c4_80, %c3_81, %c0_82] : memref<7x7x32xf32, #tpu.memory_space<vmem>>, vector<1x1x32xf32>
    %191 = vector.shape_cast %190 : vector<1x1x32xf32> to vector<32xf32>
    %192 = vector.shape_cast %191 : vector<32xf32> to vector<1x1x32xf32>
    %193 = vector.broadcast %192 : vector<1x1x32xf32> to vector<8x8x32xf32>
    %194 = arith.mulf %189, %193 : vector<8x8x32xf32>
    %195 = arith.addf %188, %194 : vector<8x8x32xf32>
    %196 = vector.extract_strided_slice %160 {offsets = [5, 0, 0], sizes = [8, 8, 32], strides = [1, 1, 1]} : vector<14x8x32xf32> to vector<8x8x32xf32>
    %c5_83 = arith.constant 5 : index
    %c3_84 = arith.constant 3 : index
    %c0_85 = arith.constant 0 : index
    %197 = vector.load %arg3[%c5_83, %c3_84, %c0_85] : memref<7x7x32xf32, #tpu.memory_space<vmem>>, vector<1x1x32xf32>
    %198 = vector.shape_cast %197 : vector<1x1x32xf32> to vector<32xf32>
    %199 = vector.shape_cast %198 : vector<32xf32> to vector<1x1x32xf32>
    %200 = vector.broadcast %199 : vector<1x1x32xf32> to vector<8x8x32xf32>
    %201 = arith.mulf %196, %200 : vector<8x8x32xf32>
    %202 = arith.addf %195, %201 : vector<8x8x32xf32>
    %203 = vector.extract_strided_slice %160 {offsets = [6, 0, 0], sizes = [8, 8, 32], strides = [1, 1, 1]} : vector<14x8x32xf32> to vector<8x8x32xf32>
    %c6_86 = arith.constant 6 : index
    %c3_87 = arith.constant 3 : index
    %c0_88 = arith.constant 0 : index
    %204 = vector.load %arg3[%c6_86, %c3_87, %c0_88] : memref<7x7x32xf32, #tpu.memory_space<vmem>>, vector<1x1x32xf32>
    %205 = vector.shape_cast %204 : vector<1x1x32xf32> to vector<32xf32>
    %206 = vector.shape_cast %205 : vector<32xf32> to vector<1x1x32xf32>
    %207 = vector.broadcast %206 : vector<1x1x32xf32> to vector<8x8x32xf32>
    %208 = arith.mulf %203, %207 : vector<8x8x32xf32>
    %209 = arith.addf %202, %208 : vector<8x8x32xf32>
    %c0_89 = arith.constant 0 : index
    %210 = arith.index_cast %0 : i32 to index
    %c4_90 = arith.constant 4 : index
    %c0_91 = arith.constant 0 : index
    %211 = vector.load %arg2[%c0_89, %210, %c4_90, %c0_91] : memref<1x14x14x32xf32, #tpu.memory_space<vmem>>, vector<1x14x8x32xf32>
    %212 = vector.shape_cast %211 : vector<1x14x8x32xf32> to vector<14x8x32xf32>
    %213 = vector.extract_strided_slice %212 {offsets = [0, 0, 0], sizes = [8, 8, 32], strides = [1, 1, 1]} : vector<14x8x32xf32> to vector<8x8x32xf32>
    %c0_92 = arith.constant 0 : index
    %c4_93 = arith.constant 4 : index
    %c0_94 = arith.constant 0 : index
    %214 = vector.load %arg3[%c0_92, %c4_93, %c0_94] : memref<7x7x32xf32, #tpu.memory_space<vmem>>, vector<1x1x32xf32>
    %215 = vector.shape_cast %214 : vector<1x1x32xf32> to vector<32xf32>
    %216 = vector.shape_cast %215 : vector<32xf32> to vector<1x1x32xf32>
    %217 = vector.broadcast %216 : vector<1x1x32xf32> to vector<8x8x32xf32>
    %218 = arith.mulf %213, %217 : vector<8x8x32xf32>
    %219 = arith.addf %209, %218 : vector<8x8x32xf32>
    %220 = vector.extract_strided_slice %212 {offsets = [1, 0, 0], sizes = [8, 8, 32], strides = [1, 1, 1]} : vector<14x8x32xf32> to vector<8x8x32xf32>
    %c1_95 = arith.constant 1 : index
    %c4_96 = arith.constant 4 : index
    %c0_97 = arith.constant 0 : index
    %221 = vector.load %arg3[%c1_95, %c4_96, %c0_97] : memref<7x7x32xf32, #tpu.memory_space<vmem>>, vector<1x1x32xf32>
    %222 = vector.shape_cast %221 : vector<1x1x32xf32> to vector<32xf32>
    %223 = vector.shape_cast %222 : vector<32xf32> to vector<1x1x32xf32>
    %224 = vector.broadcast %223 : vector<1x1x32xf32> to vector<8x8x32xf32>
    %225 = arith.mulf %220, %224 : vector<8x8x32xf32>
    %226 = arith.addf %219, %225 : vector<8x8x32xf32>
    %227 = vector.extract_strided_slice %212 {offsets = [2, 0, 0], sizes = [8, 8, 32], strides = [1, 1, 1]} : vector<14x8x32xf32> to vector<8x8x32xf32>
    %c2_98 = arith.constant 2 : index
    %c4_99 = arith.constant 4 : index
    %c0_100 = arith.constant 0 : index
    %228 = vector.load %arg3[%c2_98, %c4_99, %c0_100] : memref<7x7x32xf32, #tpu.memory_space<vmem>>, vector<1x1x32xf32>
    %229 = vector.shape_cast %228 : vector<1x1x32xf32> to vector<32xf32>
    %230 = vector.shape_cast %229 : vector<32xf32> to vector<1x1x32xf32>
    %231 = vector.broadcast %230 : vector<1x1x32xf32> to vector<8x8x32xf32>
    %232 = arith.mulf %227, %231 : vector<8x8x32xf32>
    %233 = arith.addf %226, %232 : vector<8x8x32xf32>
    %234 = vector.extract_strided_slice %212 {offsets = [3, 0, 0], sizes = [8, 8, 32], strides = [1, 1, 1]} : vector<14x8x32xf32> to vector<8x8x32xf32>
    %c3_101 = arith.constant 3 : index
    %c4_102 = arith.constant 4 : index
    %c0_103 = arith.constant 0 : index
    %235 = vector.load %arg3[%c3_101, %c4_102, %c0_103] : memref<7x7x32xf32, #tpu.memory_space<vmem>>, vector<1x1x32xf32>
    %236 = vector.shape_cast %235 : vector<1x1x32xf32> to vector<32xf32>
    %237 = vector.shape_cast %236 : vector<32xf32> to vector<1x1x32xf32>
    %238 = vector.broadcast %237 : vector<1x1x32xf32> to vector<8x8x32xf32>
    %239 = arith.mulf %234, %238 : vector<8x8x32xf32>
    %240 = arith.addf %233, %239 : vector<8x8x32xf32>
    %241 = vector.extract_strided_slice %212 {offsets = [4, 0, 0], sizes = [8, 8, 32], strides = [1, 1, 1]} : vector<14x8x32xf32> to vector<8x8x32xf32>
    %c4_104 = arith.constant 4 : index
    %c4_105 = arith.constant 4 : index
    %c0_106 = arith.constant 0 : index
    %242 = vector.load %arg3[%c4_104, %c4_105, %c0_106] : memref<7x7x32xf32, #tpu.memory_space<vmem>>, vector<1x1x32xf32>
    %243 = vector.shape_cast %242 : vector<1x1x32xf32> to vector<32xf32>
    %244 = vector.shape_cast %243 : vector<32xf32> to vector<1x1x32xf32>
    %245 = vector.broadcast %244 : vector<1x1x32xf32> to vector<8x8x32xf32>
    %246 = arith.mulf %241, %245 : vector<8x8x32xf32>
    %247 = arith.addf %240, %246 : vector<8x8x32xf32>
    %248 = vector.extract_strided_slice %212 {offsets = [5, 0, 0], sizes = [8, 8, 32], strides = [1, 1, 1]} : vector<14x8x32xf32> to vector<8x8x32xf32>
    %c5_107 = arith.constant 5 : index
    %c4_108 = arith.constant 4 : index
    %c0_109 = arith.constant 0 : index
    %249 = vector.load %arg3[%c5_107, %c4_108, %c0_109] : memref<7x7x32xf32, #tpu.memory_space<vmem>>, vector<1x1x32xf32>
    %250 = vector.shape_cast %249 : vector<1x1x32xf32> to vector<32xf32>
    %251 = vector.shape_cast %250 : vector<32xf32> to vector<1x1x32xf32>
    %252 = vector.broadcast %251 : vector<1x1x32xf32> to vector<8x8x32xf32>
    %253 = arith.mulf %248, %252 : vector<8x8x32xf32>
    %254 = arith.addf %247, %253 : vector<8x8x32xf32>
    %255 = vector.extract_strided_slice %212 {offsets = [6, 0, 0], sizes = [8, 8, 32], strides = [1, 1, 1]} : vector<14x8x32xf32> to vector<8x8x32xf32>
    %c6_110 = arith.constant 6 : index
    %c4_111 = arith.constant 4 : index
    %c0_112 = arith.constant 0 : index
    %256 = vector.load %arg3[%c6_110, %c4_111, %c0_112] : memref<7x7x32xf32, #tpu.memory_space<vmem>>, vector<1x1x32xf32>
    %257 = vector.shape_cast %256 : vector<1x1x32xf32> to vector<32xf32>
    %258 = vector.shape_cast %257 : vector<32xf32> to vector<1x1x32xf32>
    %259 = vector.broadcast %258 : vector<1x1x32xf32> to vector<8x8x32xf32>
    %260 = arith.mulf %255, %259 : vector<8x8x32xf32>
    %261 = arith.addf %254, %260 : vector<8x8x32xf32>
    %c0_113 = arith.constant 0 : index
    %262 = arith.index_cast %0 : i32 to index
    %c5_114 = arith.constant 5 : index
    %c0_115 = arith.constant 0 : index
    %263 = vector.load %arg2[%c0_113, %262, %c5_114, %c0_115] : memref<1x14x14x32xf32, #tpu.memory_space<vmem>>, vector<1x14x8x32xf32>
    %264 = vector.shape_cast %263 : vector<1x14x8x32xf32> to vector<14x8x32xf32>
    %265 = vector.extract_strided_slice %264 {offsets = [0, 0, 0], sizes = [8, 8, 32], strides = [1, 1, 1]} : vector<14x8x32xf32> to vector<8x8x32xf32>
    %c0_116 = arith.constant 0 : index
    %c5_117 = arith.constant 5 : index
    %c0_118 = arith.constant 0 : index
    %266 = vector.load %arg3[%c0_116, %c5_117, %c0_118] : memref<7x7x32xf32, #tpu.memory_space<vmem>>, vector<1x1x32xf32>
    %267 = vector.shape_cast %266 : vector<1x1x32xf32> to vector<32xf32>
    %268 = vector.shape_cast %267 : vector<32xf32> to vector<1x1x32xf32>
    %269 = vector.broadcast %268 : vector<1x1x32xf32> to vector<8x8x32xf32>
    %270 = arith.mulf %265, %269 : vector<8x8x32xf32>
    %271 = arith.addf %261, %270 : vector<8x8x32xf32>
    %272 = vector.extract_strided_slice %264 {offsets = [1, 0, 0], sizes = [8, 8, 32], strides = [1, 1, 1]} : vector<14x8x32xf32> to vector<8x8x32xf32>
    %c1_119 = arith.constant 1 : index
    %c5_120 = arith.constant 5 : index
    %c0_121 = arith.constant 0 : index
    %273 = vector.load %arg3[%c1_119, %c5_120, %c0_121] : memref<7x7x32xf32, #tpu.memory_space<vmem>>, vector<1x1x32xf32>
    %274 = vector.shape_cast %273 : vector<1x1x32xf32> to vector<32xf32>
    %275 = vector.shape_cast %274 : vector<32xf32> to vector<1x1x32xf32>
    %276 = vector.broadcast %275 : vector<1x1x32xf32> to vector<8x8x32xf32>
    %277 = arith.mulf %272, %276 : vector<8x8x32xf32>
    %278 = arith.addf %271, %277 : vector<8x8x32xf32>
    %279 = vector.extract_strided_slice %264 {offsets = [2, 0, 0], sizes = [8, 8, 32], strides = [1, 1, 1]} : vector<14x8x32xf32> to vector<8x8x32xf32>
    %c2_122 = arith.constant 2 : index
    %c5_123 = arith.constant 5 : index
    %c0_124 = arith.constant 0 : index
    %280 = vector.load %arg3[%c2_122, %c5_123, %c0_124] : memref<7x7x32xf32, #tpu.memory_space<vmem>>, vector<1x1x32xf32>
    %281 = vector.shape_cast %280 : vector<1x1x32xf32> to vector<32xf32>
    %282 = vector.shape_cast %281 : vector<32xf32> to vector<1x1x32xf32>
    %283 = vector.broadcast %282 : vector<1x1x32xf32> to vector<8x8x32xf32>
    %284 = arith.mulf %279, %283 : vector<8x8x32xf32>
    %285 = arith.addf %278, %284 : vector<8x8x32xf32>
    %286 = vector.extract_strided_slice %264 {offsets = [3, 0, 0], sizes = [8, 8, 32], strides = [1, 1, 1]} : vector<14x8x32xf32> to vector<8x8x32xf32>
    %c3_125 = arith.constant 3 : index
    %c5_126 = arith.constant 5 : index
    %c0_127 = arith.constant 0 : index
    %287 = vector.load %arg3[%c3_125, %c5_126, %c0_127] : memref<7x7x32xf32, #tpu.memory_space<vmem>>, vector<1x1x32xf32>
    %288 = vector.shape_cast %287 : vector<1x1x32xf32> to vector<32xf32>
    %289 = vector.shape_cast %288 : vector<32xf32> to vector<1x1x32xf32>
    %290 = vector.broadcast %289 : vector<1x1x32xf32> to vector<8x8x32xf32>
    %291 = arith.mulf %286, %290 : vector<8x8x32xf32>
    %292 = arith.addf %285, %291 : vector<8x8x32xf32>
    %293 = vector.extract_strided_slice %264 {offsets = [4, 0, 0], sizes = [8, 8, 32], strides = [1, 1, 1]} : vector<14x8x32xf32> to vector<8x8x32xf32>
    %c4_128 = arith.constant 4 : index
    %c5_129 = arith.constant 5 : index
    %c0_130 = arith.constant 0 : index
    %294 = vector.load %arg3[%c4_128, %c5_129, %c0_130] : memref<7x7x32xf32, #tpu.memory_space<vmem>>, vector<1x1x32xf32>
    %295 = vector.shape_cast %294 : vector<1x1x32xf32> to vector<32xf32>
    %296 = vector.shape_cast %295 : vector<32xf32> to vector<1x1x32xf32>
    %297 = vector.broadcast %296 : vector<1x1x32xf32> to vector<8x8x32xf32>
    %298 = arith.mulf %293, %297 : vector<8x8x32xf32>
    %299 = arith.addf %292, %298 : vector<8x8x32xf32>
    %300 = vector.extract_strided_slice %264 {offsets = [5, 0, 0], sizes = [8, 8, 32], strides = [1, 1, 1]} : vector<14x8x32xf32> to vector<8x8x32xf32>
    %c5_131 = arith.constant 5 : index
    %c5_132 = arith.constant 5 : index
    %c0_133 = arith.constant 0 : index
    %301 = vector.load %arg3[%c5_131, %c5_132, %c0_133] : memref<7x7x32xf32, #tpu.memory_space<vmem>>, vector<1x1x32xf32>
    %302 = vector.shape_cast %301 : vector<1x1x32xf32> to vector<32xf32>
    %303 = vector.shape_cast %302 : vector<32xf32> to vector<1x1x32xf32>
    %304 = vector.broadcast %303 : vector<1x1x32xf32> to vector<8x8x32xf32>
    %305 = arith.mulf %300, %304 : vector<8x8x32xf32>
    %306 = arith.addf %299, %305 : vector<8x8x32xf32>
    %307 = vector.extract_strided_slice %264 {offsets = [6, 0, 0], sizes = [8, 8, 32], strides = [1, 1, 1]} : vector<14x8x32xf32> to vector<8x8x32xf32>
    %c6_134 = arith.constant 6 : index
    %c5_135 = arith.constant 5 : index
    %c0_136 = arith.constant 0 : index
    %308 = vector.load %arg3[%c6_134, %c5_135, %c0_136] : memref<7x7x32xf32, #tpu.memory_space<vmem>>, vector<1x1x32xf32>
    %309 = vector.shape_cast %308 : vector<1x1x32xf32> to vector<32xf32>
    %310 = vector.shape_cast %309 : vector<32xf32> to vector<1x1x32xf32>
    %311 = vector.broadcast %310 : vector<1x1x32xf32> to vector<8x8x32xf32>
    %312 = arith.mulf %307, %311 : vector<8x8x32xf32>
    %313 = arith.addf %306, %312 : vector<8x8x32xf32>
    %c0_137 = arith.constant 0 : index
    %314 = arith.index_cast %0 : i32 to index
    %c6_138 = arith.constant 6 : index
    %c0_139 = arith.constant 0 : index
    %315 = vector.load %arg2[%c0_137, %314, %c6_138, %c0_139] : memref<1x14x14x32xf32, #tpu.memory_space<vmem>>, vector<1x14x8x32xf32>
    %316 = vector.shape_cast %315 : vector<1x14x8x32xf32> to vector<14x8x32xf32>
    %317 = vector.extract_strided_slice %316 {offsets = [0, 0, 0], sizes = [8, 8, 32], strides = [1, 1, 1]} : vector<14x8x32xf32> to vector<8x8x32xf32>
    %c0_140 = arith.constant 0 : index
    %c6_141 = arith.constant 6 : index
    %c0_142 = arith.constant 0 : index
    %318 = vector.load %arg3[%c0_140, %c6_141, %c0_142] : memref<7x7x32xf32, #tpu.memory_space<vmem>>, vector<1x1x32xf32>
    %319 = vector.shape_cast %318 : vector<1x1x32xf32> to vector<32xf32>
    %320 = vector.shape_cast %319 : vector<32xf32> to vector<1x1x32xf32>
    %321 = vector.broadcast %320 : vector<1x1x32xf32> to vector<8x8x32xf32>
    %322 = arith.mulf %317, %321 : vector<8x8x32xf32>
    %323 = arith.addf %313, %322 : vector<8x8x32xf32>
    %324 = vector.extract_strided_slice %316 {offsets = [1, 0, 0], sizes = [8, 8, 32], strides = [1, 1, 1]} : vector<14x8x32xf32> to vector<8x8x32xf32>
    %c1_143 = arith.constant 1 : index
    %c6_144 = arith.constant 6 : index
    %c0_145 = arith.constant 0 : index
    %325 = vector.load %arg3[%c1_143, %c6_144, %c0_145] : memref<7x7x32xf32, #tpu.memory_space<vmem>>, vector<1x1x32xf32>
    %326 = vector.shape_cast %325 : vector<1x1x32xf32> to vector<32xf32>
    %327 = vector.shape_cast %326 : vector<32xf32> to vector<1x1x32xf32>
    %328 = vector.broadcast %327 : vector<1x1x32xf32> to vector<8x8x32xf32>
    %329 = arith.mulf %324, %328 : vector<8x8x32xf32>
    %330 = arith.addf %323, %329 : vector<8x8x32xf32>
    %331 = vector.extract_strided_slice %316 {offsets = [2, 0, 0], sizes = [8, 8, 32], strides = [1, 1, 1]} : vector<14x8x32xf32> to vector<8x8x32xf32>
    %c2_146 = arith.constant 2 : index
    %c6_147 = arith.constant 6 : index
    %c0_148 = arith.constant 0 : index
    %332 = vector.load %arg3[%c2_146, %c6_147, %c0_148] : memref<7x7x32xf32, #tpu.memory_space<vmem>>, vector<1x1x32xf32>
    %333 = vector.shape_cast %332 : vector<1x1x32xf32> to vector<32xf32>
    %334 = vector.shape_cast %333 : vector<32xf32> to vector<1x1x32xf32>
    %335 = vector.broadcast %334 : vector<1x1x32xf32> to vector<8x8x32xf32>
    %336 = arith.mulf %331, %335 : vector<8x8x32xf32>
    %337 = arith.addf %330, %336 : vector<8x8x32xf32>
    %338 = vector.extract_strided_slice %316 {offsets = [3, 0, 0], sizes = [8, 8, 32], strides = [1, 1, 1]} : vector<14x8x32xf32> to vector<8x8x32xf32>
    %c3_149 = arith.constant 3 : index
    %c6_150 = arith.constant 6 : index
    %c0_151 = arith.constant 0 : index
    %339 = vector.load %arg3[%c3_149, %c6_150, %c0_151] : memref<7x7x32xf32, #tpu.memory_space<vmem>>, vector<1x1x32xf32>
    %340 = vector.shape_cast %339 : vector<1x1x32xf32> to vector<32xf32>
    %341 = vector.shape_cast %340 : vector<32xf32> to vector<1x1x32xf32>
    %342 = vector.broadcast %341 : vector<1x1x32xf32> to vector<8x8x32xf32>
    %343 = arith.mulf %338, %342 : vector<8x8x32xf32>
    %344 = arith.addf %337, %343 : vector<8x8x32xf32>
    %345 = vector.extract_strided_slice %316 {offsets = [4, 0, 0], sizes = [8, 8, 32], strides = [1, 1, 1]} : vector<14x8x32xf32> to vector<8x8x32xf32>
    %c4_152 = arith.constant 4 : index
    %c6_153 = arith.constant 6 : index
    %c0_154 = arith.constant 0 : index
    %346 = vector.load %arg3[%c4_152, %c6_153, %c0_154] : memref<7x7x32xf32, #tpu.memory_space<vmem>>, vector<1x1x32xf32>
    %347 = vector.shape_cast %346 : vector<1x1x32xf32> to vector<32xf32>
    %348 = vector.shape_cast %347 : vector<32xf32> to vector<1x1x32xf32>
    %349 = vector.broadcast %348 : vector<1x1x32xf32> to vector<8x8x32xf32>
    %350 = arith.mulf %345, %349 : vector<8x8x32xf32>
    %351 = arith.addf %344, %350 : vector<8x8x32xf32>
    %352 = vector.extract_strided_slice %316 {offsets = [5, 0, 0], sizes = [8, 8, 32], strides = [1, 1, 1]} : vector<14x8x32xf32> to vector<8x8x32xf32>
    %c5_155 = arith.constant 5 : index
    %c6_156 = arith.constant 6 : index
    %c0_157 = arith.constant 0 : index
    %353 = vector.load %arg3[%c5_155, %c6_156, %c0_157] : memref<7x7x32xf32, #tpu.memory_space<vmem>>, vector<1x1x32xf32>
    %354 = vector.shape_cast %353 : vector<1x1x32xf32> to vector<32xf32>
    %355 = vector.shape_cast %354 : vector<32xf32> to vector<1x1x32xf32>
    %356 = vector.broadcast %355 : vector<1x1x32xf32> to vector<8x8x32xf32>
    %357 = arith.mulf %352, %356 : vector<8x8x32xf32>
    %358 = arith.addf %351, %357 : vector<8x8x32xf32>
    %359 = vector.extract_strided_slice %316 {offsets = [6, 0, 0], sizes = [8, 8, 32], strides = [1, 1, 1]} : vector<14x8x32xf32> to vector<8x8x32xf32>
    %c6_158 = arith.constant 6 : index
    %c6_159 = arith.constant 6 : index
    %c0_160 = arith.constant 0 : index
    %360 = vector.load %arg3[%c6_158, %c6_159, %c0_160] : memref<7x7x32xf32, #tpu.memory_space<vmem>>, vector<1x1x32xf32>
    %361 = vector.shape_cast %360 : vector<1x1x32xf32> to vector<32xf32>
    %362 = vector.shape_cast %361 : vector<32xf32> to vector<1x1x32xf32>
    %363 = vector.broadcast %362 : vector<1x1x32xf32> to vector<8x8x32xf32>
    %364 = arith.mulf %359, %363 : vector<8x8x32xf32>
    %365 = arith.addf %358, %364 : vector<8x8x32xf32>
    %366 = vector.shape_cast %365 : vector<8x8x32xf32> to vector<64x32xf32>
    %c0_161 = arith.constant 0 : index
    %c0_162 = arith.constant 0 : index
    %367 = vector.load %arg4[%c0_161, %c0_162] : memref<1x32xf32, #tpu.memory_space<vmem>>, vector<1x32xf32>
    %368 = vector.shape_cast %367 : vector<1x32xf32> to vector<32xf32>
    %369 = vector.shape_cast %368 : vector<32xf32> to vector<1x32xf32>
    %370 = vector.broadcast %369 : vector<1x32xf32> to vector<64x32xf32>
    %371 = arith.addf %366, %370 : vector<64x32xf32>
    %c3_i32 = arith.constant 3 : i32
    %372 = arith.addi %0, %c3_i32 : i32
    %c0_163 = arith.constant 0 : index
    %373 = arith.index_cast %372 : i32 to index
    %c3_164 = arith.constant 3 : index
    %c0_165 = arith.constant 0 : index
    %374 = vector.load %arg2[%c0_163, %373, %c3_164, %c0_165] : memref<1x14x14x32xf32, #tpu.memory_space<vmem>>, vector<1x8x8x32xf32>
    %375 = vector.shape_cast %374 : vector<1x8x8x32xf32> to vector<8x8x32xf32>
    %376 = vector.shape_cast %375 : vector<8x8x32xf32> to vector<64x32xf32>
    %cst_166 = arith.constant dense<0.000000e+00> : vector<64xf32>
    %377 = vector.multi_reduction <add>, %371, %cst_166 [1] : vector<64x32xf32> to vector<64xf32>
    %378 = vector.shape_cast %377 : vector<64xf32> to vector<64x1xf32>
    %cst_167 = arith.constant 3.200000e+01 : f32
    %379 = vector.broadcast %cst_167 : f32 to vector<64x1xf32>
    %380 = arith.divf %378, %379 : vector<64x1xf32>
    %381 = vector.broadcast %380 : vector<64x1xf32> to vector<64x32xf32>
    %382 = arith.subf %371, %381 : vector<64x32xf32>
    %383 = arith.mulf %382, %382 : vector<64x32xf32>
    %cst_168 = arith.constant dense<0.000000e+00> : vector<64xf32>
    %384 = vector.multi_reduction <add>, %383, %cst_168 [1] : vector<64x32xf32> to vector<64xf32>
    %385 = vector.shape_cast %384 : vector<64xf32> to vector<64x1xf32>
    %cst_169 = arith.constant 3.200000e+01 : f32
    %386 = vector.broadcast %cst_169 : f32 to vector<64x1xf32>
    %387 = arith.divf %385, %386 : vector<64x1xf32>
    %cst_170 = arith.constant 9.99999997E-7 : f32
    %388 = vector.broadcast %cst_170 : f32 to vector<64x1xf32>
    %389 = arith.addf %387, %388 : vector<64x1xf32>
    %390 = math.rsqrt %389 : vector<64x1xf32>
    %391 = vector.broadcast %390 : vector<64x1xf32> to vector<64x32xf32>
    %392 = arith.mulf %382, %391 : vector<64x32xf32>
    %c0_171 = arith.constant 0 : index
    %c0_172 = arith.constant 0 : index
    %393 = vector.load %arg5[%c0_171, %c0_172] : memref<1x32xf32, #tpu.memory_space<vmem>>, vector<1x32xf32>
    %394 = vector.shape_cast %393 : vector<1x32xf32> to vector<32xf32>
    %395 = vector.shape_cast %394 : vector<32xf32> to vector<1x32xf32>
    %396 = vector.broadcast %395 : vector<1x32xf32> to vector<64x32xf32>
    %397 = arith.mulf %392, %396 : vector<64x32xf32>
    %c0_173 = arith.constant 0 : index
    %c0_174 = arith.constant 0 : index
    %398 = vector.load %arg6[%c0_173, %c0_174] : memref<1x32xf32, #tpu.memory_space<vmem>>, vector<1x32xf32>
    %399 = vector.shape_cast %398 : vector<1x32xf32> to vector<32xf32>
    %400 = vector.shape_cast %399 : vector<32xf32> to vector<1x32xf32>
    %401 = vector.broadcast %400 : vector<1x32xf32> to vector<64x32xf32>
    %402 = arith.addf %397, %401 : vector<64x32xf32>
    %c0_175 = arith.constant 0 : index
    %c0_176 = arith.constant 0 : index
    %403 = vector.load %arg7[%c0_175, %c0_176] : memref<32x128xf32, #tpu.memory_space<vmem>>, vector<32x128xf32>
    %cst_177 = arith.constant dense<0.000000e+00> : vector<64x128xf32>
    %404 = tpu.matmul %402, %403, %cst_177 {dimension_numbers = #tpu.dot_dimension_numbers<[1], [0], [0], [1], [0, 0, 1, 1], [], []>} : vector<64x32xf32>, vector<32x128xf32>, vector<64x128xf32> -> vector<64x128xf32>
    %c0_178 = arith.constant 0 : index
    %c0_179 = arith.constant 0 : index
    %405 = vector.load %arg8[%c0_178, %c0_179] : memref<1x128xf32, #tpu.memory_space<vmem>>, vector<1x128xf32>
    %406 = vector.shape_cast %405 : vector<1x128xf32> to vector<128xf32>
    %407 = vector.shape_cast %406 : vector<128xf32> to vector<1x128xf32>
    %408 = vector.broadcast %407 : vector<1x128xf32> to vector<64x128xf32>
    %409 = arith.addf %404, %408 : vector<64x128xf32>
    %cst_180 = arith.constant 5.000000e-01 : f32
    %410 = vector.broadcast %cst_180 : f32 to vector<64x128xf32>
    %411 = arith.mulf %410, %409 : vector<64x128xf32>
    %cst_181 = arith.constant 0.707106769 : f32
    %412 = vector.broadcast %cst_181 : f32 to vector<64x128xf32>
    %413 = arith.mulf %409, %412 : vector<64x128xf32>
    %414 = math.erf %413 : vector<64x128xf32>
    %cst_182 = arith.constant 1.000000e+00 : f32
    %415 = vector.broadcast %cst_182 : f32 to vector<64x128xf32>
    %416 = arith.addf %415, %414 : vector<64x128xf32>
    %417 = arith.mulf %411, %416 : vector<64x128xf32>
    %c0_183 = arith.constant 0 : index
    %c0_184 = arith.constant 0 : index
    %418 = vector.load %arg9[%c0_183, %c0_184] : memref<128x32xf32, #tpu.memory_space<vmem>>, vector<128x32xf32>
    %cst_185 = arith.constant dense<0.000000e+00> : vector<64x32xf32>
    %419 = tpu.matmul %417, %418, %cst_185 {dimension_numbers = #tpu.dot_dimension_numbers<[1], [0], [0], [1], [0, 0, 1, 1], [], []>} : vector<64x128xf32>, vector<128x32xf32>, vector<64x32xf32> -> vector<64x32xf32>
    %c0_186 = arith.constant 0 : index
    %c0_187 = arith.constant 0 : index
    %420 = vector.load %arg10[%c0_186, %c0_187] : memref<1x32xf32, #tpu.memory_space<vmem>>, vector<1x32xf32>
    %421 = vector.shape_cast %420 : vector<1x32xf32> to vector<32xf32>
    %422 = vector.shape_cast %421 : vector<32xf32> to vector<1x32xf32>
    %423 = vector.broadcast %422 : vector<1x32xf32> to vector<64x32xf32>
    %424 = arith.addf %419, %423 : vector<64x32xf32>
    %c0_188 = arith.constant 0 : index
    %c0_189 = arith.constant 0 : index
    %425 = vector.load %arg11[%c0_188, %c0_189] : memref<1x32xf32, #tpu.memory_space<vmem>>, vector<1x32xf32>
    %426 = vector.shape_cast %425 : vector<1x32xf32> to vector<32xf32>
    %427 = vector.shape_cast %426 : vector<32xf32> to vector<1x32xf32>
    %428 = vector.broadcast %427 : vector<1x32xf32> to vector<64x32xf32>
    %429 = arith.mulf %424, %428 : vector<64x32xf32>
    %430 = arith.addf %376, %429 : vector<64x32xf32>
    %431 = tpu.transpose %430, [1, 0] : vector<64x32xf32> -> vector<32x64xf32>
    %c0_190 = arith.constant 0 : index
    %c0_191 = arith.constant 0 : index
    %c0_192 = arith.constant 0 : index
    %432 = vector.load %arg12[%c0_190, %c0_191, %c0_192] : memref<1x32x64xf32, #tpu.memory_space<vmem>>, vector<1x32x64xf32>
    %433 = vector.shape_cast %432 : vector<1x32x64xf32> to vector<32x64xf32>
    %434 = vector.shape_cast %431 : vector<32x64xf32> to vector<1x32x64xf32>
    tpu.vector_store %arg12[%c0_190, %c0_191, %c0_192], %434 {strides = array<i32>} : memref<1x32x64xf32, #tpu.memory_space<vmem>>, vector<1x32x64xf32>,
    return
  }
  func.func @transform_0(%arg0: i32, %arg1: i32) -> (i32, i32, i32, i32) {
    %c0_i32 = arith.constant 0 : i32
    %c0_i32_0 = arith.constant 0 : i32
    %c0_i32_1 = arith.constant 0 : i32
    %c0_i32_2 = arith.constant 0 : i32
    return %arg0, %c0_i32, %c0_i32_0, %c0_i32_1 : i32, i32, i32, i32
  }
  func.func @transform_1(%arg0: i32, %arg1: i32) -> (i32, i32, i32) {
    %c0_i32 = arith.constant 0 : i32
    %c0_i32_0 = arith.constant 0 : i32
    %c0_i32_1 = arith.constant 0 : i32
    %c0_i32_2 = arith.constant 0 : i32
    return %c0_i32, %c0_i32_0, %c0_i32_1 : i32, i32, i32
  }
  func.func @transform_2(%arg0: i32, %arg1: i32) -> (i32, i32) {
    %c0_i32 = arith.constant 0 : i32
    %c0_i32_0 = arith.constant 0 : i32
    %c0_i32_1 = arith.constant 0 : i32
    return %c0_i32, %c0_i32_0 : i32, i32
  }
  func.func @transform_3(%arg0: i32, %arg1: i32) -> (i32, i32) {
    %c0_i32 = arith.constant 0 : i32
    %c0_i32_0 = arith.constant 0 : i32
    %c0_i32_1 = arith.constant 0 : i32
    return %c0_i32, %c0_i32_0 : i32, i32
  }
  func.func @transform_4(%arg0: i32, %arg1: i32) -> (i32, i32) {
    %c0_i32 = arith.constant 0 : i32
    %c0_i32_0 = arith.constant 0 : i32
    %c0_i32_1 = arith.constant 0 : i32
    return %c0_i32, %c0_i32_0 : i32, i32
  }
  func.func @transform_5(%arg0: i32, %arg1: i32) -> (i32, i32) {
    %c0_i32 = arith.constant 0 : i32
    %c0_i32_0 = arith.constant 0 : i32
    %c0_i32_1 = arith.constant 0 : i32
    return %c0_i32, %c0_i32_0 : i32, i32
  }
  func.func @transform_6(%arg0: i32, %arg1: i32) -> (i32, i32) {
    %c0_i32 = arith.constant 0 : i32
    %c0_i32_0 = arith.constant 0 : i32
    %c0_i32_1 = arith.constant 0 : i32
    return %c0_i32, %c0_i32_0 : i32, i32
  }
  func.func @transform_7(%arg0: i32, %arg1: i32) -> (i32, i32) {
    %c0_i32 = arith.constant 0 : i32
    %c0_i32_0 = arith.constant 0 : i32
    %c0_i32_1 = arith.constant 0 : i32
    return %c0_i32, %c0_i32_0 : i32, i32
  }
  func.func @transform_8(%arg0: i32, %arg1: i32) -> (i32, i32) {
    %c0_i32 = arith.constant 0 : i32
    %c0_i32_0 = arith.constant 0 : i32
    %c0_i32_1 = arith.constant 0 : i32
    return %c0_i32, %c0_i32_0 : i32, i32
  }
  func.func @transform_9(%arg0: i32, %arg1: i32) -> (i32, i32) {
    %c0_i32 = arith.constant 0 : i32
    %c0_i32_0 = arith.constant 0 : i32
    %c0_i32_1 = arith.constant 0 : i32
    return %c0_i32, %c0_i32_0 : i32, i32
  }
  func.func @transform_10(%arg0: i32, %arg1: i32) -> (i32, i32, i32) {
    %c0_i32 = arith.constant 0 : i32
    %c0_i32_0 = arith.constant 0 : i32
    return %arg0, %c0_i32, %arg1 : i32, i32, i32
  }
}

</mosaic_0001>

<llo_original>
// kernel: tpu_custom_call.1
$region0: #{tpu_custom_call.1}
  #allocation0 [shape = 'u32[]', space=smem, size = 0x4, offset = 0x4, fixed_abs, tag = 'smem constant byte address 0x4 - core index']
  #allocation1 [shape = 'u32[144,128]{1,0:T(1,128)}', space=vmem, size = 0x12000, scoped, tag = 'internal scratch']
  %s0 = inlined_call_operand.vmem [shape: f32[2,14,14,32], index: 0, kind: input, shape index: {}]
  %s1 = inlined_call_operand.vmem [shape: f32[7,7,32], index: 1, kind: input, shape index: {}]
  %s2 = inlined_call_operand.vmem [shape: f32[1,32], index: 2, kind: input, shape index: {}]
  %s3 = inlined_call_operand.vmem [shape: f32[1,32], index: 3, kind: input, shape index: {}]
  %s4 = inlined_call_operand.vmem [shape: f32[1,32], index: 4, kind: input, shape index: {}]
  %s5 = inlined_call_operand.vmem [shape: f32[32,128], index: 5, kind: input, shape index: {}]
  %s6 = inlined_call_operand.vmem [shape: f32[1,128], index: 6, kind: input, shape index: {}]
  %s7 = inlined_call_operand.vmem [shape: f32[128,32], index: 7, kind: input, shape index: {}]
  %s8 = inlined_call_operand.vmem [shape: f32[1,32], index: 8, kind: input, shape index: {}]
  %s9 = inlined_call_operand.vmem [shape: f32[1,32], index: 9, kind: input, shape index: {}]
  %s10 = inlined_call_operand.hbm [shape: f32[2,32,64], index: 10, kind: output, shape index: {}]
  %s11 = sld [smem:[#allocation0]]
  $region73: #{tpu_custom_call.1} parent=0
    _
  %s13 = ssub.s32 1, %s11
  %s14 = scalar_select 0, %s13, %s11
  $region1: #{tpu_custom_call.1} parent=0
    #allocation2 [shape = 'u8[32768]{0}', space=vmem, size = 0x8000, scoped, tag = 'output window, operand 0']
    #allocation3 [shape = 's32[2]{0}', space=sflag, size = 0x8, scoped, tag = 'scoped memory for tpu_custom_call.1']
    %15 = vsyncpa [#allocation3], 0
    %s16 = scalar_lea.sflag [#allocation3], 1
    %17 = vsyncpa %s16, 0
    loop: start=0, step=1, limit=4
    $region2: #{tpu_custom_call.1} parent=1 // loop_pre_header
      _
    $region3: #{tpu_custom_call.1} parent=1 // loop_header
      %s19 = sphi 0, %s23
      %p20 = scmp.ge.s32.totalorder %s19, 4
      %s26 = sphi 0, %s38
      %s27 = sphi 0, %s34
      %s28 = sphi 0, %s26
      %s29 = sphi 0, %s27
      %s30 = sphi 0, %s28
      %s31 = sphi 0, %s29
      %s41 = sphi 0, %s43
      %s44 = sphi 0, %s41
      %s45 = sphi 0, %s44
      %s61 = sphi 0, %s45
      %s65 = sphi 0, %s65
      %s67 = sphi 0, %s65
      %s68 = sphi 0, %s67
      %s82 = sphi 0, %s68
      %s86 = sphi 0, %s86
      %s88 = sphi 0, %s86
      %s89 = sphi 0, %s88
      %s103 = sphi 0, %s89
      %s107 = sphi 0, %s107
      %s109 = sphi 0, %s107
      %s110 = sphi 0, %s109
      %s124 = sphi 0, %s110
      %s128 = sphi 0, %s128
      %s130 = sphi 0, %s128
      %s131 = sphi 0, %s130
      %s145 = sphi 0, %s131
      %s149 = sphi 0, %s149
      %s151 = sphi 0, %s149
      %s152 = sphi 0, %s151
      %s166 = sphi 0, %s152
      %s170 = sphi 0, %s170
      %s172 = sphi 0, %s170
      %s173 = sphi 0, %s172
      %s187 = sphi 0, %s173
      %s191 = sphi 0, %s191
      %s193 = sphi 0, %s191
      %s194 = sphi 0, %s193
      %s208 = sphi 0, %s194
      %s212 = sphi 0, %s212
      %s214 = sphi 0, %s212
      %s215 = sphi 0, %s214
      %s229 = sphi 0, %s215
      %s233 = sphi 0, %s233
      %s235 = sphi 0, %s233
      %s236 = sphi 0, %s235
      %s250 = sphi 0, %s236
      %s258 = sphi 0, %s260
      %s261 = sphi 0, %s258
      %s262 = sphi 0, %s261
      %s278 = sphi 0, %s262
    $region4: #{tpu_custom_call.1} parent=1 // loop_header_branch
      %22 = sbr.rel (%p20) target = $region8
    $region5: #{tpu_custom_call.1} parent=1 // loop_body
      %s24 = ssub.s32 %s19, 1
      %s25 = ssub.s32 %s19, 2
      %s32 = sadd.s32 1, %s27
      %p33 = scmp.ge.s32.totalorder %s32, 1
      %s34 = scalar_select %p33, 0, %s32
      %s35 = sadd.s32 1, %s26
      %s36 = scalar_select %p33, %s35, %s26
      %p37 = scmp.ge.s32.totalorder %s36, 2
      %s38 = scalar_select %p37, 0, %s36
      %s39 = ssub.s32 %s26, %s38
      %p40 = scmp.eq.s32.totalorder %s39, 0
      %s42 = sadd.s32 %s41, 1
      %s43 = scalar_select %p40, %s41, %s42
      %p46 = pneg %p40
      %p47 = scmp.eq.s32.totalorder %s19, 1
      %p48 = por %p46, %p47
      %p49 = scmp.ne.s32.totalorder %s41, %s44
      %p50 = scmp.eq.s32.totalorder %s19, 0
      %p51 = por %p49, %p50
      %p52 = scmp.ne.s32.totalorder %s41, %s44
      %p53 = scmp.eq.s32.totalorder %s24, 1
      %p54 = por %p52, %p53
      %p55 = scmp.ne.s32.totalorder %s44, %s45
      %p56 = scmp.eq.s32.totalorder %s24, 0
      %p57 = por %p55, %p56
      %p58 = scmp.ne.s32.totalorder %s44, %s45
      %p59 = scmp.eq.s32.totalorder %s25, 1
      %p60 = por %p58, %p59
      %p62 = scmp.ne.s32.totalorder %s45, %s61
      %p63 = scmp.eq.s32.totalorder %s25, 0
      %p64 = por %p62, %p63
      %s66 = sadd.s32 %s65, 1
      %p69 = scmp.eq.s32.totalorder %s19, 1
      %p70 = scmp.ne.s32.totalorder %s65, %s67
      %p71 = scmp.eq.s32.totalorder %s19, 0
      %p72 = por %p70, %p71
      %p73 = scmp.ne.s32.totalorder %s65, %s67
      %p74 = scmp.eq.s32.totalorder %s24, 1
      %p75 = por %p73, %p74
      %p76 = scmp.ne.s32.totalorder %s67, %s68
      %p77 = scmp.eq.s32.totalorder %s24, 0
      %p78 = por %p76, %p77
      %p79 = scmp.ne.s32.totalorder %s67, %s68
      %p80 = scmp.eq.s32.totalorder %s25, 1
      %p81 = por %p79, %p80
      %p83 = scmp.ne.s32.totalorder %s68, %s82
      %p84 = scmp.eq.s32.totalorder %s25, 0
      %p85 = por %p83, %p84
      %s87 = sadd.s32 %s86, 1
      %p90 = scmp.eq.s32.totalorder %s19, 1
      %p91 = scmp.ne.s32.totalorder %s86, %s88
      %p92 = scmp.eq.s32.totalorder %s19, 0
      %p93 = por %p91, %p92
      %p94 = scmp.ne.s32.totalorder %s86, %s88
      %p95 = scmp.eq.s32.totalorder %s24, 1
      %p96 = por %p94, %p95
      %p97 = scmp.ne.s32.totalorder %s88, %s89
      %p98 = scmp.eq.s32.totalorder %s24, 0
      %p99 = por %p97, %p98
      %p100 = scmp.ne.s32.totalorder %s88, %s89
      %p101 = scmp.eq.s32.totalorder %s25, 1
      %p102 = por %p100, %p101
      %p104 = scmp.ne.s32.totalorder %s89, %s103
      %p105 = scmp.eq.s32.totalorder %s25, 0
      %p106 = por %p104, %p105
      %s108 = sadd.s32 %s107, 1
      %p111 = scmp.eq.s32.totalorder %s19, 1
      %p112 = scmp.ne.s32.totalorder %s107, %s109
      %p113 = scmp.eq.s32.totalorder %s19, 0
      %p114 = por %p112, %p113
      %p115 = scmp.ne.s32.totalorder %s107, %s109
      %p116 = scmp.eq.s32.totalorder %s24, 1
      %p117 = por %p115, %p116
      %p118 = scmp.ne.s32.totalorder %s109, %s110
      %p119 = scmp.eq.s32.totalorder %s24, 0
      %p120 = por %p118, %p119
      %p121 = scmp.ne.s32.totalorder %s109, %s110
      %p122 = scmp.eq.s32.totalorder %s25, 1
      %p123 = por %p121, %p122
      %p125 = scmp.ne.s32.totalorder %s110, %s124
      %p126 = scmp.eq.s32.totalorder %s25, 0
      %p127 = por %p125, %p126
      %s129 = sadd.s32 %s128, 1
      %p132 = scmp.eq.s32.totalorder %s19, 1
      %p133 = scmp.ne.s32.totalorder %s128, %s130
      %p134 = scmp.eq.s32.totalorder %s19, 0
      %p135 = por %p133, %p134
      %p136 = scmp.ne.s32.totalorder %s128, %s130
      %p137 = scmp.eq.s32.totalorder %s24, 1
      %p138 = por %p136, %p137
      %p139 = scmp.ne.s32.totalorder %s130, %s131
      %p140 = scmp.eq.s32.totalorder %s24, 0
      %p141 = por %p139, %p140
      %p142 = scmp.ne.s32.totalorder %s130, %s131
      %p143 = scmp.eq.s32.totalorder %s25, 1
      %p144 = por %p142, %p143
      %p146 = scmp.ne.s32.totalorder %s131, %s145
      %p147 = scmp.eq.s32.totalorder %s25, 0
      %p148 = por %p146, %p147
      %s150 = sadd.s32 %s149, 1
      %p153 = scmp.eq.s32.totalorder %s19, 1
      %p154 = scmp.ne.s32.totalorder %s149, %s151
      %p155 = scmp.eq.s32.totalorder %s19, 0
      %p156 = por %p154, %p155
      %p157 = scmp.ne.s32.totalorder %s149, %s151
      %p158 = scmp.eq.s32.totalorder %s24, 1
      %p159 = por %p157, %p158
      %p160 = scmp.ne.s32.totalorder %s151, %s152
      %p161 = scmp.eq.s32.totalorder %s24, 0
      %p162 = por %p160, %p161
      %p163 = scmp.ne.s32.totalorder %s151, %s152
      %p164 = scmp.eq.s32.totalorder %s25, 1
      %p165 = por %p163, %p164
      %p167 = scmp.ne.s32.totalorder %s152, %s166
      %p168 = scmp.eq.s32.totalorder %s25, 0
      %p169 = por %p167, %p168
      %s171 = sadd.s32 %s170, 1
      %p174 = scmp.eq.s32.totalorder %s19, 1
      %p175 = scmp.ne.s32.totalorder %s170, %s172
      %p176 = scmp.eq.s32.totalorder %s19, 0
      %p177 = por %p175, %p176
      %p178 = scmp.ne.s32.totalorder %s170, %s172
      %p179 = scmp.eq.s32.totalorder %s24, 1
      %p180 = por %p178, %p179
      %p181 = scmp.ne.s32.totalorder %s172, %s173
      %p182 = scmp.eq.s32.totalorder %s24, 0
      %p183 = por %p181, %p182
      %p184 = scmp.ne.s32.totalorder %s172, %s173
      %p185 = scmp.eq.s32.totalorder %s25, 1
      %p186 = por %p184, %p185
      %p188 = scmp.ne.s32.totalorder %s173, %s187
      %p189 = scmp.eq.s32.totalorder %s25, 0
      %p190 = por %p188, %p189
      %s192 = sadd.s32 %s191, 1
      %p195 = scmp.eq.s32.totalorder %s19, 1
      %p196 = scmp.ne.s32.totalorder %s191, %s193
      %p197 = scmp.eq.s32.totalorder %s19, 0
      %p198 = por %p196, %p197
      %p199 = scmp.ne.s32.totalorder %s191, %s193
      %p200 = scmp.eq.s32.totalorder %s24, 1
      %p201 = por %p199, %p200
      %p202 = scmp.ne.s32.totalorder %s193, %s194
      %p203 = scmp.eq.s32.totalorder %s24, 0
      %p204 = por %p202, %p203
      %p205 = scmp.ne.s32.totalorder %s193, %s194
      %p206 = scmp.eq.s32.totalorder %s25, 1
      %p207 = por %p205, %p206
      %p209 = scmp.ne.s32.totalorder %s194, %s208
      %p210 = scmp.eq.s32.totalorder %s25, 0
      %p211 = por %p209, %p210
      %s213 = sadd.s32 %s212, 1
      %p216 = scmp.eq.s32.totalorder %s19, 1
      %p217 = scmp.ne.s32.totalorder %s212, %s214
      %p218 = scmp.eq.s32.totalorder %s19, 0
      %p219 = por %p217, %p218
      %p220 = scmp.ne.s32.totalorder %s212, %s214
      %p221 = scmp.eq.s32.totalorder %s24, 1
      %p222 = por %p220, %p221
      %p223 = scmp.ne.s32.totalorder %s214, %s215
      %p224 = scmp.eq.s32.totalorder %s24, 0
      %p225 = por %p223, %p224
      %p226 = scmp.ne.s32.totalorder %s214, %s215
      %p227 = scmp.eq.s32.totalorder %s25, 1
      %p228 = por %p226, %p227
      %p230 = scmp.ne.s32.totalorder %s215, %s229
      %p231 = scmp.eq.s32.totalorder %s25, 0
      %p232 = por %p230, %p231
      %s234 = sadd.s32 %s233, 1
      %p237 = scmp.eq.s32.totalorder %s19, 1
      %p238 = scmp.ne.s32.totalorder %s233, %s235
      %p239 = scmp.eq.s32.totalorder %s19, 0
      %p240 = por %p238, %p239
      %p241 = scmp.ne.s32.totalorder %s233, %s235
      %p242 = scmp.eq.s32.totalorder %s24, 1
      %p243 = por %p241, %p242
      %p244 = scmp.ne.s32.totalorder %s235, %s236
      %p245 = scmp.eq.s32.totalorder %s24, 0
      %p246 = por %p244, %p245
      %p247 = scmp.ne.s32.totalorder %s235, %s236
      %p248 = scmp.eq.s32.totalorder %s25, 1
      %p249 = por %p247, %p248
      %p251 = scmp.ne.s32.totalorder %s236, %s250
      %p252 = scmp.eq.s32.totalorder %s25, 0
      %p253 = por %p251, %p252
      %s254 = ssub.s32 %s26, %s38
      %s255 = ssub.s32 %s27, %s34
      %s256 = sor.u32 %s254, %s255
      %p257 = scmp.eq.s32.totalorder %s256, 0
      %s259 = sadd.s32 %s258, 1
      %s260 = scalar_select %p257, %s258, %s259
      %p263 = pneg %p257
      %p264 = scmp.eq.s32.totalorder %s19, 1
      %p265 = por %p263, %p264
      %p266 = scmp.ne.s32.totalorder %s258, %s261
      %p267 = scmp.eq.s32.totalorder %s19, 0
      %p268 = por %p266, %p267
      %p269 = scmp.ne.s32.totalorder %s258, %s261
      %p270 = scmp.eq.s32.totalorder %s24, 1
      %p271 = por %p269, %p270
      %p272 = scmp.ne.s32.totalorder %s261, %s262
      %p273 = scmp.eq.s32.totalorder %s24, 0
      %p274 = por %p272, %p273
      %p275 = scmp.ne.s32.totalorder %s261, %s262
      %p276 = scmp.eq.s32.totalorder %s25, 1
      %p277 = por %p275, %p276
      %p279 = scmp.ne.s32.totalorder %s262, %s278
      %p280 = scmp.eq.s32.totalorder %s25, 0
      %p281 = por %p279, %p280
      %p282 = scmp.le.s32.totalorder 1, %s19
      %p283 = scmp.lt.s32.totalorder %s19, 3
      %p284 = pnand %p282, %p283
      %p285 = pneg %p284
      // Predicated region
      $region9: #{tpu_custom_call.1} parent=5 // pred_check
        _
      $region10: #{tpu_custom_call.1} parent=5 // pred_check_branch
        %287 = sbr.rel (%p284) target = $region12
      $region11: #{tpu_custom_call.1} parent=5 // pred_region
        %s288 = ssub.s32 %s19, 1
        // Predicated region
        $region13: #{tpu_custom_call.1} parent=11 // pred_check
          %p289 = pneg %p78
        $region14: #{tpu_custom_call.1} parent=11 // pred_check_branch
          %291 = sbr.rel (%p289) target = $region16
        $region15: #{tpu_custom_call.1} parent=11 // pred_region
          _
        $region16: #{tpu_custom_call.1} parent=11 // pred_fallthru
          _
        // Predicated region
        $region17: #{tpu_custom_call.1} parent=11 // pred_check
          %p292 = pneg %p99
        $region18: #{tpu_custom_call.1} parent=11 // pred_check_branch
          %294 = sbr.rel (%p292) target = $region20
        $region19: #{tpu_custom_call.1} parent=11 // pred_region
          _
        $region20: #{tpu_custom_call.1} parent=11 // pred_fallthru
          _
        // Predicated region
        $region21: #{tpu_custom_call.1} parent=11 // pred_check
          %p295 = pneg %p120
        $region22: #{tpu_custom_call.1} parent=11 // pred_check_branch
          %297 = sbr.rel (%p295) target = $region24
        $region23: #{tpu_custom_call.1} parent=11 // pred_region
          _
        $region24: #{tpu_custom_call.1} parent=11 // pred_fallthru
          _
        // Predicated region
        $region25: #{tpu_custom_call.1} parent=11 // pred_check
          %p298 = pneg %p141
        $region26: #{tpu_custom_call.1} parent=11 // pred_check_branch
          %300 = sbr.rel (%p298) target = $region28
        $region27: #{tpu_custom_call.1} parent=11 // pred_region
          _
        $region28: #{tpu_custom_call.1} parent=11 // pred_fallthru
          _
        // Predicated region
        $region29: #{tpu_custom_call.1} parent=11 // pred_check
          %p301 = pneg %p162
        $region30: #{tpu_custom_call.1} parent=11 // pred_check_branch
          %303 = sbr.rel (%p301) target = $region32
        $region31: #{tpu_custom_call.1} parent=11 // pred_region
          _
        $region32: #{tpu_custom_call.1} parent=11 // pred_fallthru
          _
        // Predicated region
        $region33: #{tpu_custom_call.1} parent=11 // pred_check
          %p304 = pneg %p183
        $region34: #{tpu_custom_call.1} parent=11 // pred_check_branch
          %306 = sbr.rel (%p304) target = $region36
        $region35: #{tpu_custom_call.1} parent=11 // pred_region
          _
        $region36: #{tpu_custom_call.1} parent=11 // pred_fallthru
          _
        // Predicated region
        $region37: #{tpu_custom_call.1} parent=11 // pred_check
          %p307 = pneg %p204
        $region38: #{tpu_custom_call.1} parent=11 // pred_check_branch
          %309 = sbr.rel (%p307) target = $region40
        $region39: #{tpu_custom_call.1} parent=11 // pred_region
          _
        $region40: #{tpu_custom_call.1} parent=11 // pred_fallthru
          _
        // Predicated region
        $region41: #{tpu_custom_call.1} parent=11 // pred_check
          %p310 = pneg %p225
        $region42: #{tpu_custom_call.1} parent=11 // pred_check_branch
          %312 = sbr.rel (%p310) target = $region44
        $region43: #{tpu_custom_call.1} parent=11 // pred_region
          _
        $region44: #{tpu_custom_call.1} parent=11 // pred_fallthru
          _
        // Predicated region
        $region45: #{tpu_custom_call.1} parent=11 // pred_check
          %p313 = pneg %p246
        $region46: #{tpu_custom_call.1} parent=11 // pred_check_branch
          %315 = sbr.rel (%p313) target = $region48
        $region47: #{tpu_custom_call.1} parent=11 // pred_region
          _
        $region48: #{tpu_custom_call.1} parent=11 // pred_fallthru
          _
      $region12: #{tpu_custom_call.1} parent=5 // pred_fallthru
        _
      %p316 = scmp.lt.s32.totalorder %s19, 2
      // Predicated region
      $region49: #{tpu_custom_call.1} parent=5 // pred_check
        %p317 = pneg %p316
      $region50: #{tpu_custom_call.1} parent=5 // pred_check_branch
        %319 = sbr.rel (%p317) target = $region52
      $region51: #{tpu_custom_call.1} parent=5 // pred_region
        // Predicated region
        $region53: #{tpu_custom_call.1} parent=51 // pred_check
          %p320 = pneg %p51
        $region54: #{tpu_custom_call.1} parent=51 // pred_check_branch
          %322 = sbr.rel (%p320) target = $region56
        $region55: #{tpu_custom_call.1} parent=51 // pred_region
          %p323 = scmp.lt.s32.totalorder %s26, 1
          %s324 = scalar_select %p323, %s26, 1
          %s325 = smul.addr %s324, 28
          %s326 = smul.addr %s325, 8
          %s327 = scalar_lea.vmem %s0, %s326
        $region56: #{tpu_custom_call.1} parent=51 // pred_fallthru
          _
      $region52: #{tpu_custom_call.1} parent=5 // pred_fallthru
        _
      %p328 = scmp.le.s32.totalorder 1, %s19
      %p329 = scmp.lt.s32.totalorder %s19, 3
      %p330 = pnand %p328, %p329
      %p331 = pneg %p330
      // Predicated region
      $region57: #{tpu_custom_call.1} parent=5 // pred_check
        _
      $region58: #{tpu_custom_call.1} parent=5 // pred_check_branch
        %333 = sbr.rel (%p330) target = $region60
      $region59: #{tpu_custom_call.1} parent=5 // pred_region
        %s334 = ssub.s32 %s19, 1
        %p335 = scmp.lt.s32.totalorder %s28, 1
        %s336 = scalar_select %p335, %s28, 1
        %s337 = smul.addr %s336, 28
        %s338 = smul.addr %s337, 8
        %s339 = scalar_lea.vmem %s0, %s338
        %p340 = pneg %p57
        %p341 = pneg %p54
        %p342 = pneg %p78
        %p343 = pneg %p75
        %p344 = pneg %p99
        %p345 = pneg %p96
        %p346 = pneg %p120
        %p347 = pneg %p117
        %p348 = pneg %p141
        %p349 = pneg %p138
        %p350 = pneg %p162
        %p351 = pneg %p159
        %p352 = pneg %p183
        %p353 = pneg %p180
        %p354 = pneg %p204
        %p355 = pneg %p201
        %p356 = pneg %p225
        %p357 = pneg %p222
        %p358 = pneg %p246
        %p359 = pneg %p243
        %p360 = pneg %p274
        %p361 = pneg %p271
        %s362 = sand.u32 %s261, 1
        %s363 = scalar_lea.sflag [#allocation3], %s362
        %s364 = sand.u32 %s261, 1
        %s365 = smul.addr %s364, 32
        %s366 = scalar_lea.vmem [#allocation2], %s365
        %p367 = scmp.lt.s32.totalorder %s28, 1
        %s368 = scalar_select %p367, %s28, 1
        %s369 = smul.addr %s368, 28
        %s370 = smul.addr %s369, 8
        %s371 = scalar_lea.vmem %s0, %s370
        %s372 = smul.u32 %s29, 8
        %s373 = smul.u32 %s372, 16
        %s374 = scalar_lea.vmem %s371, %s373
        %v375 = vld [vmem:[%s374] sm:$0xff]
        %v376 = vld [vmem:[%s374 + $0x10] sm:$0xff]
        %v377 = vld [vmem:[%s374 + $0x20] sm:$0xff]
        %v378 = vld [vmem:[%s374 + $0x30] sm:$0xff]
        %v379 = vld [vmem:[%s374 + $0x40] sm:$0xff]
        %v380 = vld [vmem:[%s374 + $0x50] sm:$0xff]
        %v381 = vld [vmem:[%s374 + $0x60] sm:$0xff]
        %v382 = vld [vmem:[%s374 + $0x70] sm:$0xff]
        %v383 = vld [vmem:[%s374 + $0x80] sm:$0xff]
        %v384 = vld [vmem:[%s374 + $0x90] sm:$0xff]
        %v385 = vld [vmem:[%s374 + $0xa0] sm:$0xff]
        %v386 = vld [vmem:[%s374 + $0xb0] sm:$0xff]
        %v387 = vld [vmem:[%s374 + $0xc0] sm:$0xff]
        %v388 = vld [vmem:[%s374 + $0xd0] sm:$0xff]
        %v389 = vld [vmem:[%s1] sm:$0x1]
        %v390 = vlaneseq
        %v391 = vshrl.u32 %v390, 7
        %v392 = vsub.s32 0, %v391
        %v393 = vrot.slane %v389, %v392
        %v394 = vmul.f32 %v375, %v393
        %v395 = vmul.f32 %v376, %v393
        %v396 = vmul.f32 %v377, %v393
        %v397 = vmul.f32 %v378, %v393
        %v398 = vmul.f32 %v379, %v393
        %v399 = vmul.f32 %v380, %v393
        %v400 = vmul.f32 %v381, %v393
        %v401 = vmul.f32 %v382, %v393
        %v402 = vadd.f32 %v394, 0.0
        %v403 = vadd.f32 %v395, 0.0
        %v404 = vadd.f32 %v396, 0.0
        %v405 = vadd.f32 %v397, 0.0
        %v406 = vadd.f32 %v398, 0.0
        %v407 = vadd.f32 %v399, 0.0
        %v408 = vadd.f32 %v400, 0.0
        %v409 = vadd.f32 %v401, 0.0
        %s410 = scalar_lea.vmem %s1, 8
        %v411 = vld [vmem:[%s410] sm:$0x1]
        %v412 = vlaneseq
        %v413 = vshrl.u32 %v412, 7
        %v414 = vsub.s32 0, %v413
        %v415 = vrot.slane %v411, %v414
        %v416 = vmul.f32 %v376, %v415
        %v417 = vmul.f32 %v377, %v415
        %v418 = vmul.f32 %v378, %v415
        %v419 = vmul.f32 %v379, %v415
        %v420 = vmul.f32 %v380, %v415
        %v421 = vmul.f32 %v381, %v415
        %v422 = vmul.f32 %v382, %v415
        %v423 = vmul.f32 %v383, %v415
        %v424 = vadd.f32 %v402, %v416
        %v425 = vadd.f32 %v403, %v417
        %v426 = vadd.f32 %v404, %v418
        %v427 = vadd.f32 %v405, %v419
        %v428 = vadd.f32 %v406, %v420
        %v429 = vadd.f32 %v407, %v421
        %v430 = vadd.f32 %v408, %v422
        %v431 = vadd.f32 %v409, %v423
        %s432 = scalar_lea.vmem %s1, 16
        %v433 = vld [vmem:[%s432] sm:$0x1]
        %v434 = vlaneseq
        %v435 = vshrl.u32 %v434, 7
        %v436 = vsub.s32 0, %v435
        %v437 = vrot.slane %v433, %v436
        %v438 = vmul.f32 %v377, %v437
        %v439 = vmul.f32 %v378, %v437
        %v440 = vmul.f32 %v379, %v437
        %v441 = vmul.f32 %v380, %v437
        %v442 = vmul.f32 %v381, %v437
        %v443 = vmul.f32 %v382, %v437
        %v444 = vmul.f32 %v383, %v437
        %v445 = vmul.f32 %v384, %v437
        %v446 = vadd.f32 %v424, %v438
        %v447 = vadd.f32 %v425, %v439
        %v448 = vadd.f32 %v426, %v440
        %v449 = vadd.f32 %v427, %v441
        %v450 = vadd.f32 %v428, %v442
        %v451 = vadd.f32 %v429, %v443
        %v452 = vadd.f32 %v430, %v444
        %v453 = vadd.f32 %v431, %v445
        %s454 = scalar_lea.vmem %s1, 24
        %v455 = vld [vmem:[%s454] sm:$0x1]
        %v456 = vlaneseq
        %v457 = vshrl.u32 %v456, 7
        %v458 = vsub.s32 0, %v457
        %v459 = vrot.slane %v455, %v458
        %v460 = vmul.f32 %v378, %v459
        %v461 = vmul.f32 %v379, %v459
        %v462 = vmul.f32 %v380, %v459
        %v463 = vmul.f32 %v381, %v459
        %v464 = vmul.f32 %v382, %v459
        %v465 = vmul.f32 %v383, %v459
        %v466 = vmul.f32 %v384, %v459
        %v467 = vmul.f32 %v385, %v459
        %v468 = vadd.f32 %v446, %v460
        %v469 = vadd.f32 %v447, %v461
        %v470 = vadd.f32 %v448, %v462
        %v471 = vadd.f32 %v449, %v463
        %v472 = vadd.f32 %v450, %v464
        %v473 = vadd.f32 %v451, %v465
        %v474 = vadd.f32 %v452, %v466
        %v475 = vadd.f32 %v453, %v467
        %s476 = scalar_lea.vmem %s1, 32
        %v477 = vld [vmem:[%s476] sm:$0x1]
        %v478 = vlaneseq
        %v479 = vshrl.u32 %v478, 7
        %v480 = vsub.s32 0, %v479
        %v481 = vrot.slane %v477, %v480
        %v482 = vmul.f32 %v379, %v481
        %v483 = vmul.f32 %v380, %v481
        %v484 = vmul.f32 %v381, %v481
        %v485 = vmul.f32 %v382, %v481
        %v486 = vmul.f32 %v383, %v481
        %v487 = vmul.f32 %v384, %v481
        %v488 = vmul.f32 %v385, %v481
        %v489 = vmul.f32 %v386, %v481
        %v490 = vadd.f32 %v468, %v482
        %v491 = vadd.f32 %v469, %v483
        %v492 = vadd.f32 %v470, %v484
        %v493 = vadd.f32 %v471, %v485
        %v494 = vadd.f32 %v472, %v486
        %v495 = vadd.f32 %v473, %v487
        %v496 = vadd.f32 %v474, %v488
        %v497 = vadd.f32 %v475, %v489
        %s498 = scalar_lea.vmem %s1, 40
        %v499 = vld [vmem:[%s498] sm:$0x1]
        %v500 = vlaneseq
        %v501 = vshrl.u32 %v500, 7
        %v502 = vsub.s32 0, %v501
        %v503 = vrot.slane %v499, %v502
        %v504 = vmul.f32 %v380, %v503
        %v505 = vmul.f32 %v381, %v503
        %v506 = vmul.f32 %v382, %v503
        %v507 = vmul.f32 %v383, %v503
        %v508 = vmul.f32 %v384, %v503
        %v509 = vmul.f32 %v385, %v503
        %v510 = vmul.f32 %v386, %v503
        %v511 = vmul.f32 %v387, %v503
        %v512 = vadd.f32 %v490, %v504
        %v513 = vadd.f32 %v491, %v505
        %v514 = vadd.f32 %v492, %v506
        %v515 = vadd.f32 %v493, %v507
        %v516 = vadd.f32 %v494, %v508
        %v517 = vadd.f32 %v495, %v509
        %v518 = vadd.f32 %v496, %v510
        %v519 = vadd.f32 %v497, %v511
        %s520 = scalar_lea.vmem %s1, 48
        %v521 = vld [vmem:[%s520] sm:$0x1]
        %v522 = vlaneseq
        %v523 = vshrl.u32 %v522, 7
        %v524 = vsub.s32 0, %v523
        %v525 = vrot.slane %v521, %v524
        %v526 = vmul.f32 %v381, %v525
        %v527 = vmul.f32 %v382, %v525
        %v528 = vmul.f32 %v383, %v525
        %v529 = vmul.f32 %v384, %v525
        %v530 = vmul.f32 %v385, %v525
        %v531 = vmul.f32 %v386, %v525
        %v532 = vmul.f32 %v387, %v525
        %v533 = vmul.f32 %v388, %v525
        %v534 = vadd.f32 %v512, %v526
        %v535 = vadd.f32 %v513, %v527
        %v536 = vadd.f32 %v514, %v528
        %v537 = vadd.f32 %v515, %v529
        %v538 = vadd.f32 %v516, %v530
        %v539 = vadd.f32 %v517, %v531
        %v540 = vadd.f32 %v518, %v532
        %v541 = vadd.f32 %v519, %v533
        %v542 = vld [vmem:[%s374 + $0x1] sm:$0xff]
        %v543 = vld [vmem:[%s374 + $0x11] sm:$0xff]
        %v544 = vld [vmem:[%s374 + $0x21] sm:$0xff]
        %v545 = vld [vmem:[%s374 + $0x31] sm:$0xff]
        %v546 = vld [vmem:[%s374 + $0x41] sm:$0xff]
        %v547 = vld [vmem:[%s374 + $0x51] sm:$0xff]
        %v548 = vld [vmem:[%s374 + $0x61] sm:$0xff]
        %v549 = vld [vmem:[%s374 + $0x71] sm:$0xff]
        %v550 = vld [vmem:[%s374 + $0x81] sm:$0xff]
        %v551 = vld [vmem:[%s374 + $0x91] sm:$0xff]
        %v552 = vld [vmem:[%s374 + $0xa1] sm:$0xff]
        %v553 = vld [vmem:[%s374 + $0xb1] sm:$0xff]
        %v554 = vld [vmem:[%s374 + $0xc1] sm:$0xff]
        %v555 = vld [vmem:[%s374 + $0xd1] sm:$0xff]
        %v556 = vld [vmem:[%s1 + $0x1] sm:$0x1]
        %v557 = vlaneseq
        %v558 = vshrl.u32 %v557, 7
        %v559 = vsub.s32 0, %v558
        %v560 = vrot.slane %v556, %v559
        %v561 = vmul.f32 %v542, %v560
        %v562 = vmul.f32 %v543, %v560
        %v563 = vmul.f32 %v544, %v560
        %v564 = vmul.f32 %v545, %v560
        %v565 = vmul.f32 %v546, %v560
        %v566 = vmul.f32 %v547, %v560
        %v567 = vmul.f32 %v548, %v560
        %v568 = vmul.f32 %v549, %v560
        %v569 = vadd.f32 %v534, %v561
        %v570 = vadd.f32 %v535, %v562
        %v571 = vadd.f32 %v536, %v563
        %v572 = vadd.f32 %v537, %v564
        %v573 = vadd.f32 %v538, %v565
        %v574 = vadd.f32 %v539, %v566
        %v575 = vadd.f32 %v540, %v567
        %v576 = vadd.f32 %v541, %v568
        %v577 = vld [vmem:[%s410 + $0x1] sm:$0x1]
        %v578 = vlaneseq
        %v579 = vshrl.u32 %v578, 7
        %v580 = vsub.s32 0, %v579
        %v581 = vrot.slane %v577, %v580
        %v582 = vmul.f32 %v543, %v581
        %v583 = vmul.f32 %v544, %v581
        %v584 = vmul.f32 %v545, %v581
        %v585 = vmul.f32 %v546, %v581
        %v586 = vmul.f32 %v547, %v581
        %v587 = vmul.f32 %v548, %v581
        %v588 = vmul.f32 %v549, %v581
        %v589 = vmul.f32 %v550, %v581
        %v590 = vadd.f32 %v569, %v582
        %v591 = vadd.f32 %v570, %v583
        %v592 = vadd.f32 %v571, %v584
        %v593 = vadd.f32 %v572, %v585
        %v594 = vadd.f32 %v573, %v586
        %v595 = vadd.f32 %v574, %v587
        %v596 = vadd.f32 %v575, %v588
        %v597 = vadd.f32 %v576, %v589
        %v598 = vld [vmem:[%s432 + $0x1] sm:$0x1]
        %v599 = vlaneseq
        %v600 = vshrl.u32 %v599, 7
        %v601 = vsub.s32 0, %v600
        %v602 = vrot.slane %v598, %v601
        %v603 = vmul.f32 %v544, %v602
        %v604 = vmul.f32 %v545, %v602
        %v605 = vmul.f32 %v546, %v602
        %v606 = vmul.f32 %v547, %v602
        %v607 = vmul.f32 %v548, %v602
        %v608 = vmul.f32 %v549, %v602
        %v609 = vmul.f32 %v550, %v602
        %v610 = vmul.f32 %v551, %v602
        %v611 = vadd.f32 %v590, %v603
        %v612 = vadd.f32 %v591, %v604
        %v613 = vadd.f32 %v592, %v605
        %v614 = vadd.f32 %v593, %v606
        %v615 = vadd.f32 %v594, %v607
        %v616 = vadd.f32 %v595, %v608
        %v617 = vadd.f32 %v596, %v609
        %v618 = vadd.f32 %v597, %v610
        %v619 = vld [vmem:[%s454 + $0x1] sm:$0x1]
        %v620 = vlaneseq
        %v621 = vshrl.u32 %v620, 7
        %v622 = vsub.s32 0, %v621
        %v623 = vrot.slane %v619, %v622
        %v624 = vmul.f32 %v545, %v623
        %v625 = vmul.f32 %v546, %v623
        %v626 = vmul.f32 %v547, %v623
        %v627 = vmul.f32 %v548, %v623
        %v628 = vmul.f32 %v549, %v623
        %v629 = vmul.f32 %v550, %v623
        %v630 = vmul.f32 %v551, %v623
        %v631 = vmul.f32 %v552, %v623
        %v632 = vadd.f32 %v611, %v624
        %v633 = vadd.f32 %v612, %v625
        %v634 = vadd.f32 %v613, %v626
        %v635 = vadd.f32 %v614, %v627
        %v636 = vadd.f32 %v615, %v628
        %v637 = vadd.f32 %v616, %v629
        %v638 = vadd.f32 %v617, %v630
        %v639 = vadd.f32 %v618, %v631
        %v640 = vld [vmem:[%s476 + $0x1] sm:$0x1]
        %v641 = vlaneseq
        %v642 = vshrl.u32 %v641, 7
        %v643 = vsub.s32 0, %v642
        %v644 = vrot.slane %v640, %v643
        %v645 = vmul.f32 %v546, %v644
        %v646 = vmul.f32 %v547, %v644
        %v647 = vmul.f32 %v548, %v644
        %v648 = vmul.f32 %v549, %v644
        %v649 = vmul.f32 %v550, %v644
        %v650 = vmul.f32 %v551, %v644
        %v651 = vmul.f32 %v552, %v644
        %v652 = vmul.f32 %v553, %v644
        %v653 = vadd.f32 %v632, %v645
        %v654 = vadd.f32 %v633, %v646
        %v655 = vadd.f32 %v634, %v647
        %v656 = vadd.f32 %v635, %v648
        %v657 = vadd.f32 %v636, %v649
        %v658 = vadd.f32 %v637, %v650
        %v659 = vadd.f32 %v638, %v651
        %v660 = vadd.f32 %v639, %v652
        %v661 = vld [vmem:[%s498 + $0x1] sm:$0x1]
        %v662 = vlaneseq
        %v663 = vshrl.u32 %v662, 7
        %v664 = vsub.s32 0, %v663
        %v665 = vrot.slane %v661, %v664
        %v666 = vmul.f32 %v547, %v665
        %v667 = vmul.f32 %v548, %v665
        %v668 = vmul.f32 %v549, %v665
        %v669 = vmul.f32 %v550, %v665
        %v670 = vmul.f32 %v551, %v665
        %v671 = vmul.f32 %v552, %v665
        %v672 = vmul.f32 %v553, %v665
        %v673 = vmul.f32 %v554, %v665
        %v674 = vadd.f32 %v653, %v666
        %v675 = vadd.f32 %v654, %v667
        %v676 = vadd.f32 %v655, %v668
        %v677 = vadd.f32 %v656, %v669
        %v678 = vadd.f32 %v657, %v670
        %v679 = vadd.f32 %v658, %v671
        %v680 = vadd.f32 %v659, %v672
        %v681 = vadd.f32 %v660, %v673
        %v682 = vld [vmem:[%s520 + $0x1] sm:$0x1]
        %v683 = vlaneseq
        %v684 = vshrl.u32 %v683, 7
        %v685 = vsub.s32 0, %v684
        %v686 = vrot.slane %v682, %v685
        %v687 = vmul.f32 %v548, %v686
        %v688 = vmul.f32 %v549, %v686
        %v689 = vmul.f32 %v550, %v686
        %v690 = vmul.f32 %v551, %v686
        %v691 = vmul.f32 %v552, %v686
        %v692 = vmul.f32 %v553, %v686
        %v693 = vmul.f32 %v554, %v686
        %v694 = vmul.f32 %v555, %v686
        %v695 = vadd.f32 %v674, %v687
        %v696 = vadd.f32 %v675, %v688
        %v697 = vadd.f32 %v676, %v689
        %v698 = vadd.f32 %v677, %v690
        %v699 = vadd.f32 %v678, %v691
        %v700 = vadd.f32 %v679, %v692
        %v701 = vadd.f32 %v680, %v693
        %v702 = vadd.f32 %v681, %v694
        %v703 = vld [vmem:[%s374 + $0x2] sm:$0xff]
        %v704 = vld [vmem:[%s374 + $0x12] sm:$0xff]
        %v705 = vld [vmem:[%s374 + $0x22] sm:$0xff]
        %v706 = vld [vmem:[%s374 + $0x32] sm:$0xff]
        %v707 = vld [vmem:[%s374 + $0x42] sm:$0xff]
        %v708 = vld [vmem:[%s374 + $0x52] sm:$0xff]
        %v709 = vld [vmem:[%s374 + $0x62] sm:$0xff]
        %v710 = vld [vmem:[%s374 + $0x72] sm:$0xff]
        %v711 = vld [vmem:[%s374 + $0x82] sm:$0xff]
        %v712 = vld [vmem:[%s374 + $0x92] sm:$0xff]
        %v713 = vld [vmem:[%s374 + $0xa2] sm:$0xff]
        %v714 = vld [vmem:[%s374 + $0xb2] sm:$0xff]
        %v715 = vld [vmem:[%s374 + $0xc2] sm:$0xff]
        %v716 = vld [vmem:[%s374 + $0xd2] sm:$0xff]
        %v717 = vld [vmem:[%s1 + $0x2] sm:$0x1]
        %v718 = vlaneseq
        %v719 = vshrl.u32 %v718, 7
        %v720 = vsub.s32 0, %v719
        %v721 = vrot.slane %v717, %v720
        %v722 = vmul.f32 %v703, %v721
        %v723 = vmul.f32 %v704, %v721
        %v724 = vmul.f32 %v705, %v721
        %v725 = vmul.f32 %v706, %v721
        %v726 = vmul.f32 %v707, %v721
        %v727 = vmul.f32 %v708, %v721
        %v728 = vmul.f32 %v709, %v721
        %v729 = vmul.f32 %v710, %v721
        %v730 = vadd.f32 %v695, %v722
        %v731 = vadd.f32 %v696, %v723
        %v732 = vadd.f32 %v697, %v724
        %v733 = vadd.f32 %v698, %v725
        %v734 = vadd.f32 %v699, %v726
        %v735 = vadd.f32 %v700, %v727
        %v736 = vadd.f32 %v701, %v728
        %v737 = vadd.f32 %v702, %v729
        %v738 = vld [vmem:[%s410 + $0x2] sm:$0x1]
        %v739 = vlaneseq
        %v740 = vshrl.u32 %v739, 7
        %v741 = vsub.s32 0, %v740
        %v742 = vrot.slane %v738, %v741
        %v743 = vmul.f32 %v704, %v742
        %v744 = vmul.f32 %v705, %v742
        %v745 = vmul.f32 %v706, %v742
        %v746 = vmul.f32 %v707, %v742
        %v747 = vmul.f32 %v708, %v742
        %v748 = vmul.f32 %v709, %v742
        %v749 = vmul.f32 %v710, %v742
        %v750 = vmul.f32 %v711, %v742
        %v751 = vadd.f32 %v730, %v743
        %v752 = vadd.f32 %v731, %v744
        %v753 = vadd.f32 %v732, %v745
        %v754 = vadd.f32 %v733, %v746
        %v755 = vadd.f32 %v734, %v747
        %v756 = vadd.f32 %v735, %v748
        %v757 = vadd.f32 %v736, %v749
        %v758 = vadd.f32 %v737, %v750
        %v759 = vld [vmem:[%s432 + $0x2] sm:$0x1]
        %v760 = vlaneseq
        %v761 = vshrl.u32 %v760, 7
        %v762 = vsub.s32 0, %v761
        %v763 = vrot.slane %v759, %v762
        %v764 = vmul.f32 %v705, %v763
        %v765 = vmul.f32 %v706, %v763
        %v766 = vmul.f32 %v707, %v763
        %v767 = vmul.f32 %v708, %v763
        %v768 = vmul.f32 %v709, %v763
        %v769 = vmul.f32 %v710, %v763
        %v770 = vmul.f32 %v711, %v763
        %v771 = vmul.f32 %v712, %v763
        %v772 = vadd.f32 %v751, %v764
        %v773 = vadd.f32 %v752, %v765
        %v774 = vadd.f32 %v753, %v766
        %v775 = vadd.f32 %v754, %v767
        %v776 = vadd.f32 %v755, %v768
        %v777 = vadd.f32 %v756, %v769
        %v778 = vadd.f32 %v757, %v770
        %v779 = vadd.f32 %v758, %v771
        %v780 = vld [vmem:[%s454 + $0x2] sm:$0x1]
        %v781 = vlaneseq
        %v782 = vshrl.u32 %v781, 7
        %v783 = vsub.s32 0, %v782
        %v784 = vrot.slane %v780, %v783
        %v785 = vmul.f32 %v706, %v784
        %v786 = vmul.f32 %v707, %v784
        %v787 = vmul.f32 %v708, %v784
        %v788 = vmul.f32 %v709, %v784
        %v789 = vmul.f32 %v710, %v784
        %v790 = vmul.f32 %v711, %v784
        %v791 = vmul.f32 %v712, %v784
        %v792 = vmul.f32 %v713, %v784
        %v793 = vadd.f32 %v772, %v785
        %v794 = vadd.f32 %v773, %v786
        %v795 = vadd.f32 %v774, %v787
        %v796 = vadd.f32 %v775, %v788
        %v797 = vadd.f32 %v776, %v789
        %v798 = vadd.f32 %v777, %v790
        %v799 = vadd.f32 %v778, %v791
        %v800 = vadd.f32 %v779, %v792
        %v801 = vld [vmem:[%s476 + $0x2] sm:$0x1]
        %v802 = vlaneseq
        %v803 = vshrl.u32 %v802, 7
        %v804 = vsub.s32 0, %v803
        %v805 = vrot.slane %v801, %v804
        %v806 = vmul.f32 %v707, %v805
        %v807 = vmul.f32 %v708, %v805
        %v808 = vmul.f32 %v709, %v805
        %v809 = vmul.f32 %v710, %v805
        %v810 = vmul.f32 %v711, %v805
        %v811 = vmul.f32 %v712, %v805
        %v812 = vmul.f32 %v713, %v805
        %v813 = vmul.f32 %v714, %v805
        %v814 = vadd.f32 %v793, %v806
        %v815 = vadd.f32 %v794, %v807
        %v816 = vadd.f32 %v795, %v808
        %v817 = vadd.f32 %v796, %v809
        %v818 = vadd.f32 %v797, %v810
        %v819 = vadd.f32 %v798, %v811
        %v820 = vadd.f32 %v799, %v812
        %v821 = vadd.f32 %v800, %v813
        %v822 = vld [vmem:[%s498 + $0x2] sm:$0x1]
        %v823 = vlaneseq
        %v824 = vshrl.u32 %v823, 7
        %v825 = vsub.s32 0, %v824
        %v826 = vrot.slane %v822, %v825
        %v827 = vmul.f32 %v708, %v826
        %v828 = vmul.f32 %v709, %v826
        %v829 = vmul.f32 %v710, %v826
        %v830 = vmul.f32 %v711, %v826
        %v831 = vmul.f32 %v712, %v826
        %v832 = vmul.f32 %v713, %v826
        %v833 = vmul.f32 %v714, %v826
        %v834 = vmul.f32 %v715, %v826
        %v835 = vadd.f32 %v814, %v827
        %v836 = vadd.f32 %v815, %v828
        %v837 = vadd.f32 %v816, %v829
        %v838 = vadd.f32 %v817, %v830
        %v839 = vadd.f32 %v818, %v831
        %v840 = vadd.f32 %v819, %v832
        %v841 = vadd.f32 %v820, %v833
        %v842 = vadd.f32 %v821, %v834
        %v843 = vld [vmem:[%s520 + $0x2] sm:$0x1]
        %v844 = vlaneseq
        %v845 = vshrl.u32 %v844, 7
        %v846 = vsub.s32 0, %v845
        %v847 = vrot.slane %v843, %v846
        %v848 = vmul.f32 %v709, %v847
        %v849 = vmul.f32 %v710, %v847
        %v850 = vmul.f32 %v711, %v847
        %v851 = vmul.f32 %v712, %v847
        %v852 = vmul.f32 %v713, %v847
        %v853 = vmul.f32 %v714, %v847
        %v854 = vmul.f32 %v715, %v847
        %v855 = vmul.f32 %v716, %v847
        %v856 = vadd.f32 %v835, %v848
        %v857 = vadd.f32 %v836, %v849
        %v858 = vadd.f32 %v837, %v850
        %v859 = vadd.f32 %v838, %v851
        %v860 = vadd.f32 %v839, %v852
        %v861 = vadd.f32 %v840, %v853
        %v862 = vadd.f32 %v841, %v854
        %v863 = vadd.f32 %v842, %v855
        %v864 = vld [vmem:[%s374 + $0x3] sm:$0xff]
        %v865 = vld [vmem:[%s374 + $0x13] sm:$0xff]
        %v866 = vld [vmem:[%s374 + $0x23] sm:$0xff]
        %v867 = vld [vmem:[%s374 + $0x33] sm:$0xff]
        %v868 = vld [vmem:[%s374 + $0x43] sm:$0xff]
        %v869 = vld [vmem:[%s374 + $0x53] sm:$0xff]
        %v870 = vld [vmem:[%s374 + $0x63] sm:$0xff]
        %v871 = vld [vmem:[%s374 + $0x73] sm:$0xff]
        %v872 = vld [vmem:[%s374 + $0x83] sm:$0xff]
        %v873 = vld [vmem:[%s374 + $0x93] sm:$0xff]
        %v874 = vld [vmem:[%s374 + $0xa3] sm:$0xff]
        %v875 = vld [vmem:[%s374 + $0xb3] sm:$0xff]
        %v876 = vld [vmem:[%s374 + $0xc3] sm:$0xff]
        %v877 = vld [vmem:[%s374 + $0xd3] sm:$0xff]
        %v878 = vld [vmem:[%s1 + $0x3] sm:$0x1]
        %v879 = vlaneseq
        %v880 = vshrl.u32 %v879, 7
        %v881 = vsub.s32 0, %v880
        %v882 = vrot.slane %v878, %v881
        %v883 = vmul.f32 %v864, %v882
        %v884 = vmul.f32 %v865, %v882
        %v885 = vmul.f32 %v866, %v882
        %v886 = vmul.f32 %v867, %v882
        %v887 = vmul.f32 %v868, %v882
        %v888 = vmul.f32 %v869, %v882
        %v889 = vmul.f32 %v870, %v882
        %v890 = vmul.f32 %v871, %v882
        %v891 = vadd.f32 %v856, %v883
        %v892 = vadd.f32 %v857, %v884
        %v893 = vadd.f32 %v858, %v885
        %v894 = vadd.f32 %v859, %v886
        %v895 = vadd.f32 %v860, %v887
        %v896 = vadd.f32 %v861, %v888
        %v897 = vadd.f32 %v862, %v889
        %v898 = vadd.f32 %v863, %v890
        %v899 = vld [vmem:[%s410 + $0x3] sm:$0x1]
        %v900 = vlaneseq
        %v901 = vshrl.u32 %v900, 7
        %v902 = vsub.s32 0, %v901
        %v903 = vrot.slane %v899, %v902
        %v904 = vmul.f32 %v865, %v903
        %v905 = vmul.f32 %v866, %v903
        %v906 = vmul.f32 %v867, %v903
        %v907 = vmul.f32 %v868, %v903
        %v908 = vmul.f32 %v869, %v903
        %v909 = vmul.f32 %v870, %v903
        %v910 = vmul.f32 %v871, %v903
        %v911 = vmul.f32 %v872, %v903
        %v912 = vadd.f32 %v891, %v904
        %v913 = vadd.f32 %v892, %v905
        %v914 = vadd.f32 %v893, %v906
        %v915 = vadd.f32 %v894, %v907
        %v916 = vadd.f32 %v895, %v908
        %v917 = vadd.f32 %v896, %v909
        %v918 = vadd.f32 %v897, %v910
        %v919 = vadd.f32 %v898, %v911
        %v920 = vld [vmem:[%s432 + $0x3] sm:$0x1]
        %v921 = vlaneseq
        %v922 = vshrl.u32 %v921, 7
        %v923 = vsub.s32 0, %v922
        %v924 = vrot.slane %v920, %v923
        %v925 = vmul.f32 %v866, %v924
        %v926 = vmul.f32 %v867, %v924
        %v927 = vmul.f32 %v868, %v924
        %v928 = vmul.f32 %v869, %v924
        %v929 = vmul.f32 %v870, %v924
        %v930 = vmul.f32 %v871, %v924
        %v931 = vmul.f32 %v872, %v924
        %v932 = vmul.f32 %v873, %v924
        %v933 = vadd.f32 %v912, %v925
        %v934 = vadd.f32 %v913, %v926
        %v935 = vadd.f32 %v914, %v927
        %v936 = vadd.f32 %v915, %v928
        %v937 = vadd.f32 %v916, %v929
        %v938 = vadd.f32 %v917, %v930
        %v939 = vadd.f32 %v918, %v931
        %v940 = vadd.f32 %v919, %v932
        %v941 = vld [vmem:[%s454 + $0x3] sm:$0x1]
        %v942 = vlaneseq
        %v943 = vshrl.u32 %v942, 7
        %v944 = vsub.s32 0, %v943
        %v945 = vrot.slane %v941, %v944
        %v946 = vmul.f32 %v867, %v945
        %v947 = vmul.f32 %v868, %v945
        %v948 = vmul.f32 %v869, %v945
        %v949 = vmul.f32 %v870, %v945
        %v950 = vmul.f32 %v871, %v945
        %v951 = vmul.f32 %v872, %v945
        %v952 = vmul.f32 %v873, %v945
        %v953 = vmul.f32 %v874, %v945
        %v954 = vadd.f32 %v933, %v946
        %v955 = vadd.f32 %v934, %v947
        %v956 = vadd.f32 %v935, %v948
        %v957 = vadd.f32 %v936, %v949
        %v958 = vadd.f32 %v937, %v950
        %v959 = vadd.f32 %v938, %v951
        %v960 = vadd.f32 %v939, %v952
        %v961 = vadd.f32 %v940, %v953
        %v962 = vld [vmem:[%s476 + $0x3] sm:$0x1]
        %v963 = vlaneseq
        %v964 = vshrl.u32 %v963, 7
        %v965 = vsub.s32 0, %v964
        %v966 = vrot.slane %v962, %v965
        %v967 = vmul.f32 %v868, %v966
        %v968 = vmul.f32 %v869, %v966
        %v969 = vmul.f32 %v870, %v966
        %v970 = vmul.f32 %v871, %v966
        %v971 = vmul.f32 %v872, %v966
        %v972 = vmul.f32 %v873, %v966
        %v973 = vmul.f32 %v874, %v966
        %v974 = vmul.f32 %v875, %v966
        %v975 = vadd.f32 %v954, %v967
        %v976 = vadd.f32 %v955, %v968
        %v977 = vadd.f32 %v956, %v969
        %v978 = vadd.f32 %v957, %v970
        %v979 = vadd.f32 %v958, %v971
        %v980 = vadd.f32 %v959, %v972
        %v981 = vadd.f32 %v960, %v973
        %v982 = vadd.f32 %v961, %v974
        %v983 = vld [vmem:[%s498 + $0x3] sm:$0x1]
        %v984 = vlaneseq
        %v985 = vshrl.u32 %v984, 7
        %v986 = vsub.s32 0, %v985
        %v987 = vrot.slane %v983, %v986
        %v988 = vmul.f32 %v869, %v987
        %v989 = vmul.f32 %v870, %v987
        %v990 = vmul.f32 %v871, %v987
        %v991 = vmul.f32 %v872, %v987
        %v992 = vmul.f32 %v873, %v987
        %v993 = vmul.f32 %v874, %v987
        %v994 = vmul.f32 %v875, %v987
        %v995 = vmul.f32 %v876, %v987
        %v996 = vadd.f32 %v975, %v988
        %v997 = vadd.f32 %v976, %v989
        %v998 = vadd.f32 %v977, %v990
        %v999 = vadd.f32 %v978, %v991
        %v1000 = vadd.f32 %v979, %v992
        %v1001 = vadd.f32 %v980, %v993
        %v1002 = vadd.f32 %v981, %v994
        %v1003 = vadd.f32 %v982, %v995
        %v1004 = vld [vmem:[%s520 + $0x3] sm:$0x1]
        %v1005 = vlaneseq
        %v1006 = vshrl.u32 %v1005, 7
        %v1007 = vsub.s32 0, %v1006
        %v1008 = vrot.slane %v1004, %v1007
        %v1009 = vmul.f32 %v870, %v1008
        %v1010 = vmul.f32 %v871, %v1008
        %v1011 = vmul.f32 %v872, %v1008
        %v1012 = vmul.f32 %v873, %v1008
        %v1013 = vmul.f32 %v874, %v1008
        %v1014 = vmul.f32 %v875, %v1008
        %v1015 = vmul.f32 %v876, %v1008
        %v1016 = vmul.f32 %v877, %v1008
        %v1017 = vadd.f32 %v996, %v1009
        %v1018 = vadd.f32 %v997, %v1010
        %v1019 = vadd.f32 %v998, %v1011
        %v1020 = vadd.f32 %v999, %v1012
        %v1021 = vadd.f32 %v1000, %v1013
        %v1022 = vadd.f32 %v1001, %v1014
        %v1023 = vadd.f32 %v1002, %v1015
        %v1024 = vadd.f32 %v1003, %v1016
        %v1025 = vld [vmem:[%s374 + $0x4] sm:$0xff]
        %v1026 = vld [vmem:[%s374 + $0x14] sm:$0xff]
        %v1027 = vld [vmem:[%s374 + $0x24] sm:$0xff]
        %v1028 = vld [vmem:[%s374 + $0x34] sm:$0xff]
        %v1029 = vld [vmem:[%s374 + $0x44] sm:$0xff]
        %v1030 = vld [vmem:[%s374 + $0x54] sm:$0xff]
        %v1031 = vld [vmem:[%s374 + $0x64] sm:$0xff]
        %v1032 = vld [vmem:[%s374 + $0x74] sm:$0xff]
        %v1033 = vld [vmem:[%s374 + $0x84] sm:$0xff]
        %v1034 = vld [vmem:[%s374 + $0x94] sm:$0xff]
        %v1035 = vld [vmem:[%s374 + $0xa4] sm:$0xff]
        %v1036 = vld [vmem:[%s374 + $0xb4] sm:$0xff]
        %v1037 = vld [vmem:[%s374 + $0xc4] sm:$0xff]
        %v1038 = vld [vmem:[%s374 + $0xd4] sm:$0xff]
        %v1039 = vld [vmem:[%s1 + $0x4] sm:$0x1]
        %v1040 = vlaneseq
        %v1041 = vshrl.u32 %v1040, 7
        %v1042 = vsub.s32 0, %v1041
        %v1043 = vrot.slane %v1039, %v1042
        %v1044 = vmul.f32 %v1025, %v1043
        %v1045 = vmul.f32 %v1026, %v1043
        %v1046 = vmul.f32 %v1027, %v1043
        %v1047 = vmul.f32 %v1028, %v1043
        %v1048 = vmul.f32 %v1029, %v1043
        %v1049 = vmul.f32 %v1030, %v1043
        %v1050 = vmul.f32 %v1031, %v1043
        %v1051 = vmul.f32 %v1032, %v1043
        %v1052 = vadd.f32 %v1017, %v1044
        %v1053 = vadd.f32 %v1018, %v1045
        %v1054 = vadd.f32 %v1019, %v1046
        %v1055 = vadd.f32 %v1020, %v1047
        %v1056 = vadd.f32 %v1021, %v1048
        %v1057 = vadd.f32 %v1022, %v1049
        %v1058 = vadd.f32 %v1023, %v1050
        %v1059 = vadd.f32 %v1024, %v1051
        %v1060 = vld [vmem:[%s410 + $0x4] sm:$0x1]
        %v1061 = vlaneseq
        %v1062 = vshrl.u32 %v1061, 7
        %v1063 = vsub.s32 0, %v1062
        %v1064 = vrot.slane %v1060, %v1063
        %v1065 = vmul.f32 %v1026, %v1064
        %v1066 = vmul.f32 %v1027, %v1064
        %v1067 = vmul.f32 %v1028, %v1064
        %v1068 = vmul.f32 %v1029, %v1064
        %v1069 = vmul.f32 %v1030, %v1064
        %v1070 = vmul.f32 %v1031, %v1064
        %v1071 = vmul.f32 %v1032, %v1064
        %v1072 = vmul.f32 %v1033, %v1064
        %v1073 = vadd.f32 %v1052, %v1065
        %v1074 = vadd.f32 %v1053, %v1066
        %v1075 = vadd.f32 %v1054, %v1067
        %v1076 = vadd.f32 %v1055, %v1068
        %v1077 = vadd.f32 %v1056, %v1069
        %v1078 = vadd.f32 %v1057, %v1070
        %v1079 = vadd.f32 %v1058, %v1071
        %v1080 = vadd.f32 %v1059, %v1072
        %v1081 = vld [vmem:[%s432 + $0x4] sm:$0x1]
        %v1082 = vlaneseq
        %v1083 = vshrl.u32 %v1082, 7
        %v1084 = vsub.s32 0, %v1083
        %v1085 = vrot.slane %v1081, %v1084
        %v1086 = vmul.f32 %v1027, %v1085
        %v1087 = vmul.f32 %v1028, %v1085
        %v1088 = vmul.f32 %v1029, %v1085
        %v1089 = vmul.f32 %v1030, %v1085
        %v1090 = vmul.f32 %v1031, %v1085
        %v1091 = vmul.f32 %v1032, %v1085
        %v1092 = vmul.f32 %v1033, %v1085
        %v1093 = vmul.f32 %v1034, %v1085
        %v1094 = vadd.f32 %v1073, %v1086
        %v1095 = vadd.f32 %v1074, %v1087
        %v1096 = vadd.f32 %v1075, %v1088
        %v1097 = vadd.f32 %v1076, %v1089
        %v1098 = vadd.f32 %v1077, %v1090
        %v1099 = vadd.f32 %v1078, %v1091
        %v1100 = vadd.f32 %v1079, %v1092
        %v1101 = vadd.f32 %v1080, %v1093
        %v1102 = vld [vmem:[%s454 + $0x4] sm:$0x1]
        %v1103 = vlaneseq
        %v1104 = vshrl.u32 %v1103, 7
        %v1105 = vsub.s32 0, %v1104
        %v1106 = vrot.slane %v1102, %v1105
        %v1107 = vmul.f32 %v1028, %v1106
        %v1108 = vmul.f32 %v1029, %v1106
        %v1109 = vmul.f32 %v1030, %v1106
        %v1110 = vmul.f32 %v1031, %v1106
        %v1111 = vmul.f32 %v1032, %v1106
        %v1112 = vmul.f32 %v1033, %v1106
        %v1113 = vmul.f32 %v1034, %v1106
        %v1114 = vmul.f32 %v1035, %v1106
        %v1115 = vadd.f32 %v1094, %v1107
        %v1116 = vadd.f32 %v1095, %v1108
        %v1117 = vadd.f32 %v1096, %v1109
        %v1118 = vadd.f32 %v1097, %v1110
        %v1119 = vadd.f32 %v1098, %v1111
        %v1120 = vadd.f32 %v1099, %v1112
        %v1121 = vadd.f32 %v1100, %v1113
        %v1122 = vadd.f32 %v1101, %v1114
        %v1123 = vld [vmem:[%s476 + $0x4] sm:$0x1]
        %v1124 = vlaneseq
        %v1125 = vshrl.u32 %v1124, 7
        %v1126 = vsub.s32 0, %v1125
        %v1127 = vrot.slane %v1123, %v1126
        %v1128 = vmul.f32 %v1029, %v1127
        %v1129 = vmul.f32 %v1030, %v1127
        %v1130 = vmul.f32 %v1031, %v1127
        %v1131 = vmul.f32 %v1032, %v1127
        %v1132 = vmul.f32 %v1033, %v1127
        %v1133 = vmul.f32 %v1034, %v1127
        %v1134 = vmul.f32 %v1035, %v1127
        %v1135 = vmul.f32 %v1036, %v1127
        %v1136 = vadd.f32 %v1115, %v1128
        %v1137 = vadd.f32 %v1116, %v1129
        %v1138 = vadd.f32 %v1117, %v1130
        %v1139 = vadd.f32 %v1118, %v1131
        %v1140 = vadd.f32 %v1119, %v1132
        %v1141 = vadd.f32 %v1120, %v1133
        %v1142 = vadd.f32 %v1121, %v1134
        %v1143 = vadd.f32 %v1122, %v1135
        %v1144 = vld [vmem:[%s498 + $0x4] sm:$0x1]
        %v1145 = vlaneseq
        %v1146 = vshrl.u32 %v1145, 7
        %v1147 = vsub.s32 0, %v1146
        %v1148 = vrot.slane %v1144, %v1147
        %v1149 = vmul.f32 %v1030, %v1148
        %v1150 = vmul.f32 %v1031, %v1148
        %v1151 = vmul.f32 %v1032, %v1148
        %v1152 = vmul.f32 %v1033, %v1148
        %v1153 = vmul.f32 %v1034, %v1148
        %v1154 = vmul.f32 %v1035, %v1148
        %v1155 = vmul.f32 %v1036, %v1148
        %v1156 = vmul.f32 %v1037, %v1148
        %v1157 = vadd.f32 %v1136, %v1149
        %v1158 = vadd.f32 %v1137, %v1150
        %v1159 = vadd.f32 %v1138, %v1151
        %v1160 = vadd.f32 %v1139, %v1152
        %v1161 = vadd.f32 %v1140, %v1153
        %v1162 = vadd.f32 %v1141, %v1154
        %v1163 = vadd.f32 %v1142, %v1155
        %v1164 = vadd.f32 %v1143, %v1156
        %v1165 = vld [vmem:[%s520 + $0x4] sm:$0x1]
        %v1166 = vlaneseq
        %v1167 = vshrl.u32 %v1166, 7
        %v1168 = vsub.s32 0, %v1167
        %v1169 = vrot.slane %v1165, %v1168
        %v1170 = vmul.f32 %v1031, %v1169
        %v1171 = vmul.f32 %v1032, %v1169
        %v1172 = vmul.f32 %v1033, %v1169
        %v1173 = vmul.f32 %v1034, %v1169
        %v1174 = vmul.f32 %v1035, %v1169
        %v1175 = vmul.f32 %v1036, %v1169
        %v1176 = vmul.f32 %v1037, %v1169
        %v1177 = vmul.f32 %v1038, %v1169
        %v1178 = vadd.f32 %v1157, %v1170
        %v1179 = vadd.f32 %v1158, %v1171
        %v1180 = vadd.f32 %v1159, %v1172
        %v1181 = vadd.f32 %v1160, %v1173
        %v1182 = vadd.f32 %v1161, %v1174
        %v1183 = vadd.f32 %v1162, %v1175
        %v1184 = vadd.f32 %v1163, %v1176
        %v1185 = vadd.f32 %v1164, %v1177
        %v1186 = vld [vmem:[%s374 + $0x5] sm:$0xff]
        %v1187 = vld [vmem:[%s374 + $0x15] sm:$0xff]
        %v1188 = vld [vmem:[%s374 + $0x25] sm:$0xff]
        %v1189 = vld [vmem:[%s374 + $0x35] sm:$0xff]
        %v1190 = vld [vmem:[%s374 + $0x45] sm:$0xff]
        %v1191 = vld [vmem:[%s374 + $0x55] sm:$0xff]
        %v1192 = vld [vmem:[%s374 + $0x65] sm:$0xff]
        %v1193 = vld [vmem:[%s374 + $0x75] sm:$0xff]
        %v1194 = vld [vmem:[%s374 + $0x85] sm:$0xff]
        %v1195 = vld [vmem:[%s374 + $0x95] sm:$0xff]
        %v1196 = vld [vmem:[%s374 + $0xa5] sm:$0xff]
        %v1197 = vld [vmem:[%s374 + $0xb5] sm:$0xff]
        %v1198 = vld [vmem:[%s374 + $0xc5] sm:$0xff]
        %v1199 = vld [vmem:[%s374 + $0xd5] sm:$0xff]
        %v1200 = vld [vmem:[%s1 + $0x5] sm:$0x1]
        %v1201 = vlaneseq
        %v1202 = vshrl.u32 %v1201, 7
        %v1203 = vsub.s32 0, %v1202
        %v1204 = vrot.slane %v1200, %v1203
        %v1205 = vmul.f32 %v1186, %v1204
        %v1206 = vmul.f32 %v1187, %v1204
        %v1207 = vmul.f32 %v1188, %v1204
        %v1208 = vmul.f32 %v1189, %v1204
        %v1209 = vmul.f32 %v1190, %v1204
        %v1210 = vmul.f32 %v1191, %v1204
        %v1211 = vmul.f32 %v1192, %v1204
        %v1212 = vmul.f32 %v1193, %v1204
        %v1213 = vadd.f32 %v1178, %v1205
        %v1214 = vadd.f32 %v1179, %v1206
        %v1215 = vadd.f32 %v1180, %v1207
        %v1216 = vadd.f32 %v1181, %v1208
        %v1217 = vadd.f32 %v1182, %v1209
        %v1218 = vadd.f32 %v1183, %v1210
        %v1219 = vadd.f32 %v1184, %v1211
        %v1220 = vadd.f32 %v1185, %v1212
        %v1221 = vld [vmem:[%s410 + $0x5] sm:$0x1]
        %v1222 = vlaneseq
        %v1223 = vshrl.u32 %v1222, 7
        %v1224 = vsub.s32 0, %v1223
        %v1225 = vrot.slane %v1221, %v1224
        %v1226 = vmul.f32 %v1187, %v1225
        %v1227 = vmul.f32 %v1188, %v1225
        %v1228 = vmul.f32 %v1189, %v1225
        %v1229 = vmul.f32 %v1190, %v1225
        %v1230 = vmul.f32 %v1191, %v1225
        %v1231 = vmul.f32 %v1192, %v1225
        %v1232 = vmul.f32 %v1193, %v1225
        %v1233 = vmul.f32 %v1194, %v1225
        %v1234 = vadd.f32 %v1213, %v1226
        %v1235 = vadd.f32 %v1214, %v1227
        %v1236 = vadd.f32 %v1215, %v1228
        %v1237 = vadd.f32 %v1216, %v1229
        %v1238 = vadd.f32 %v1217, %v1230
        %v1239 = vadd.f32 %v1218, %v1231
        %v1240 = vadd.f32 %v1219, %v1232
        %v1241 = vadd.f32 %v1220, %v1233
        %v1242 = vld [vmem:[%s432 + $0x5] sm:$0x1]
        %v1243 = vlaneseq
        %v1244 = vshrl.u32 %v1243, 7
        %v1245 = vsub.s32 0, %v1244
        %v1246 = vrot.slane %v1242, %v1245
        %v1247 = vmul.f32 %v1188, %v1246
        %v1248 = vmul.f32 %v1189, %v1246
        %v1249 = vmul.f32 %v1190, %v1246
        %v1250 = vmul.f32 %v1191, %v1246
        %v1251 = vmul.f32 %v1192, %v1246
        %v1252 = vmul.f32 %v1193, %v1246
        %v1253 = vmul.f32 %v1194, %v1246
        %v1254 = vmul.f32 %v1195, %v1246
        %v1255 = vadd.f32 %v1234, %v1247
        %v1256 = vadd.f32 %v1235, %v1248
        %v1257 = vadd.f32 %v1236, %v1249
        %v1258 = vadd.f32 %v1237, %v1250
        %v1259 = vadd.f32 %v1238, %v1251
        %v1260 = vadd.f32 %v1239, %v1252
        %v1261 = vadd.f32 %v1240, %v1253
        %v1262 = vadd.f32 %v1241, %v1254
        %v1263 = vld [vmem:[%s454 + $0x5] sm:$0x1]
        %v1264 = vlaneseq
        %v1265 = vshrl.u32 %v1264, 7
        %v1266 = vsub.s32 0, %v1265
        %v1267 = vrot.slane %v1263, %v1266
        %v1268 = vmul.f32 %v1189, %v1267
        %v1269 = vmul.f32 %v1190, %v1267
        %v1270 = vmul.f32 %v1191, %v1267
        %v1271 = vmul.f32 %v1192, %v1267
        %v1272 = vmul.f32 %v1193, %v1267
        %v1273 = vmul.f32 %v1194, %v1267
        %v1274 = vmul.f32 %v1195, %v1267
        %v1275 = vmul.f32 %v1196, %v1267
        %v1276 = vadd.f32 %v1255, %v1268
        %v1277 = vadd.f32 %v1256, %v1269
        %v1278 = vadd.f32 %v1257, %v1270
        %v1279 = vadd.f32 %v1258, %v1271
        %v1280 = vadd.f32 %v1259, %v1272
        %v1281 = vadd.f32 %v1260, %v1273
        %v1282 = vadd.f32 %v1261, %v1274
        %v1283 = vadd.f32 %v1262, %v1275
        %v1284 = vld [vmem:[%s476 + $0x5] sm:$0x1]
        %v1285 = vlaneseq
        %v1286 = vshrl.u32 %v1285, 7
        %v1287 = vsub.s32 0, %v1286
        %v1288 = vrot.slane %v1284, %v1287
        %v1289 = vmul.f32 %v1190, %v1288
        %v1290 = vmul.f32 %v1191, %v1288
        %v1291 = vmul.f32 %v1192, %v1288
        %v1292 = vmul.f32 %v1193, %v1288
        %v1293 = vmul.f32 %v1194, %v1288
        %v1294 = vmul.f32 %v1195, %v1288
        %v1295 = vmul.f32 %v1196, %v1288
        %v1296 = vmul.f32 %v1197, %v1288
        %v1297 = vadd.f32 %v1276, %v1289
        %v1298 = vadd.f32 %v1277, %v1290
        %v1299 = vadd.f32 %v1278, %v1291
        %v1300 = vadd.f32 %v1279, %v1292
        %v1301 = vadd.f32 %v1280, %v1293
        %v1302 = vadd.f32 %v1281, %v1294
        %v1303 = vadd.f32 %v1282, %v1295
        %v1304 = vadd.f32 %v1283, %v1296
        %v1305 = vld [vmem:[%s498 + $0x5] sm:$0x1]
        %v1306 = vlaneseq
        %v1307 = vshrl.u32 %v1306, 7
        %v1308 = vsub.s32 0, %v1307
        %v1309 = vrot.slane %v1305, %v1308
        %v1310 = vmul.f32 %v1191, %v1309
        %v1311 = vmul.f32 %v1192, %v1309
        %v1312 = vmul.f32 %v1193, %v1309
        %v1313 = vmul.f32 %v1194, %v1309
        %v1314 = vmul.f32 %v1195, %v1309
        %v1315 = vmul.f32 %v1196, %v1309
        %v1316 = vmul.f32 %v1197, %v1309
        %v1317 = vmul.f32 %v1198, %v1309
        %v1318 = vadd.f32 %v1297, %v1310
        %v1319 = vadd.f32 %v1298, %v1311
        %v1320 = vadd.f32 %v1299, %v1312
        %v1321 = vadd.f32 %v1300, %v1313
        %v1322 = vadd.f32 %v1301, %v1314
        %v1323 = vadd.f32 %v1302, %v1315
        %v1324 = vadd.f32 %v1303, %v1316
        %v1325 = vadd.f32 %v1304, %v1317
        %v1326 = vld [vmem:[%s520 + $0x5] sm:$0x1]
        %v1327 = vlaneseq
        %v1328 = vshrl.u32 %v1327, 7
        %v1329 = vsub.s32 0, %v1328
        %v1330 = vrot.slane %v1326, %v1329
        %v1331 = vmul.f32 %v1192, %v1330
        %v1332 = vmul.f32 %v1193, %v1330
        %v1333 = vmul.f32 %v1194, %v1330
        %v1334 = vmul.f32 %v1195, %v1330
        %v1335 = vmul.f32 %v1196, %v1330
        %v1336 = vmul.f32 %v1197, %v1330
        %v1337 = vmul.f32 %v1198, %v1330
        %v1338 = vmul.f32 %v1199, %v1330
        %v1339 = vadd.f32 %v1318, %v1331
        %v1340 = vadd.f32 %v1319, %v1332
        %v1341 = vadd.f32 %v1320, %v1333
        %v1342 = vadd.f32 %v1321, %v1334
        %v1343 = vadd.f32 %v1322, %v1335
        %v1344 = vadd.f32 %v1323, %v1336
        %v1345 = vadd.f32 %v1324, %v1337
        %v1346 = vadd.f32 %v1325, %v1338
        %v1347 = vld [vmem:[%s374 + $0x6] sm:$0xff]
        %v1348 = vld [vmem:[%s374 + $0x16] sm:$0xff]
        %v1349 = vld [vmem:[%s374 + $0x26] sm:$0xff]
        %v1350 = vld [vmem:[%s374 + $0x36] sm:$0xff]
        %v1351 = vld [vmem:[%s374 + $0x46] sm:$0xff]
        %v1352 = vld [vmem:[%s374 + $0x56] sm:$0xff]
        %v1353 = vld [vmem:[%s374 + $0x66] sm:$0xff]
        %v1354 = vld [vmem:[%s374 + $0x76] sm:$0xff]
        %v1355 = vld [vmem:[%s374 + $0x86] sm:$0xff]
        %v1356 = vld [vmem:[%s374 + $0x96] sm:$0xff]
        %v1357 = vld [vmem:[%s374 + $0xa6] sm:$0xff]
        %v1358 = vld [vmem:[%s374 + $0xb6] sm:$0xff]
        %v1359 = vld [vmem:[%s374 + $0xc6] sm:$0xff]
        %v1360 = vld [vmem:[%s374 + $0xd6] sm:$0xff]
        %v1361 = vld [vmem:[%s1 + $0x6] sm:$0x1]
        %v1362 = vlaneseq
        %v1363 = vshrl.u32 %v1362, 7
        %v1364 = vsub.s32 0, %v1363
        %v1365 = vrot.slane %v1361, %v1364
        %v1366 = vmul.f32 %v1347, %v1365
        %v1367 = vmul.f32 %v1348, %v1365
        %v1368 = vmul.f32 %v1349, %v1365
        %v1369 = vmul.f32 %v1350, %v1365
        %v1370 = vmul.f32 %v1351, %v1365
        %v1371 = vmul.f32 %v1352, %v1365
        %v1372 = vmul.f32 %v1353, %v1365
        %v1373 = vmul.f32 %v1354, %v1365
        %v1374 = vadd.f32 %v1339, %v1366
        %v1375 = vadd.f32 %v1340, %v1367
        %v1376 = vadd.f32 %v1341, %v1368
        %v1377 = vadd.f32 %v1342, %v1369
        %v1378 = vadd.f32 %v1343, %v1370
        %v1379 = vadd.f32 %v1344, %v1371
        %v1380 = vadd.f32 %v1345, %v1372
        %v1381 = vadd.f32 %v1346, %v1373
        %v1382 = vld [vmem:[%s410 + $0x6] sm:$0x1]
        %v1383 = vlaneseq
        %v1384 = vshrl.u32 %v1383, 7
        %v1385 = vsub.s32 0, %v1384
        %v1386 = vrot.slane %v1382, %v1385
        %v1387 = vmul.f32 %v1348, %v1386
        %v1388 = vmul.f32 %v1349, %v1386
        %v1389 = vmul.f32 %v1350, %v1386
        %v1390 = vmul.f32 %v1351, %v1386
        %v1391 = vmul.f32 %v1352, %v1386
        %v1392 = vmul.f32 %v1353, %v1386
        %v1393 = vmul.f32 %v1354, %v1386
        %v1394 = vmul.f32 %v1355, %v1386
        %v1395 = vadd.f32 %v1374, %v1387
        %v1396 = vadd.f32 %v1375, %v1388
        %v1397 = vadd.f32 %v1376, %v1389
        %v1398 = vadd.f32 %v1377, %v1390
        %v1399 = vadd.f32 %v1378, %v1391
        %v1400 = vadd.f32 %v1379, %v1392
        %v1401 = vadd.f32 %v1380, %v1393
        %v1402 = vadd.f32 %v1381, %v1394
        %v1403 = vld [vmem:[%s432 + $0x6] sm:$0x1]
        %v1404 = vlaneseq
        %v1405 = vshrl.u32 %v1404, 7
        %v1406 = vsub.s32 0, %v1405
        %v1407 = vrot.slane %v1403, %v1406
        %v1408 = vmul.f32 %v1349, %v1407
        %v1409 = vmul.f32 %v1350, %v1407
        %v1410 = vmul.f32 %v1351, %v1407
        %v1411 = vmul.f32 %v1352, %v1407
        %v1412 = vmul.f32 %v1353, %v1407
        %v1413 = vmul.f32 %v1354, %v1407
        %v1414 = vmul.f32 %v1355, %v1407
        %v1415 = vmul.f32 %v1356, %v1407
        %v1416 = vadd.f32 %v1395, %v1408
        %v1417 = vadd.f32 %v1396, %v1409
        %v1418 = vadd.f32 %v1397, %v1410
        %v1419 = vadd.f32 %v1398, %v1411
        %v1420 = vadd.f32 %v1399, %v1412
        %v1421 = vadd.f32 %v1400, %v1413
        %v1422 = vadd.f32 %v1401, %v1414
        %v1423 = vadd.f32 %v1402, %v1415
        %v1424 = vld [vmem:[%s454 + $0x6] sm:$0x1]
        %v1425 = vlaneseq
        %v1426 = vshrl.u32 %v1425, 7
        %v1427 = vsub.s32 0, %v1426
        %v1428 = vrot.slane %v1424, %v1427
        %v1429 = vmul.f32 %v1350, %v1428
        %v1430 = vmul.f32 %v1351, %v1428
        %v1431 = vmul.f32 %v1352, %v1428
        %v1432 = vmul.f32 %v1353, %v1428
        %v1433 = vmul.f32 %v1354, %v1428
        %v1434 = vmul.f32 %v1355, %v1428
        %v1435 = vmul.f32 %v1356, %v1428
        %v1436 = vmul.f32 %v1357, %v1428
        %v1437 = vadd.f32 %v1416, %v1429
        %v1438 = vadd.f32 %v1417, %v1430
        %v1439 = vadd.f32 %v1418, %v1431
        %v1440 = vadd.f32 %v1419, %v1432
        %v1441 = vadd.f32 %v1420, %v1433
        %v1442 = vadd.f32 %v1421, %v1434
        %v1443 = vadd.f32 %v1422, %v1435
        %v1444 = vadd.f32 %v1423, %v1436
        %v1445 = vld [vmem:[%s476 + $0x6] sm:$0x1]
        %v1446 = vlaneseq
        %v1447 = vshrl.u32 %v1446, 7
        %v1448 = vsub.s32 0, %v1447
        %v1449 = vrot.slane %v1445, %v1448
        %v1450 = vmul.f32 %v1351, %v1449
        %v1451 = vmul.f32 %v1352, %v1449
        %v1452 = vmul.f32 %v1353, %v1449
        %v1453 = vmul.f32 %v1354, %v1449
        %v1454 = vmul.f32 %v1355, %v1449
        %v1455 = vmul.f32 %v1356, %v1449
        %v1456 = vmul.f32 %v1357, %v1449
        %v1457 = vmul.f32 %v1358, %v1449
        %v1458 = vadd.f32 %v1437, %v1450
        %v1459 = vadd.f32 %v1438, %v1451
        %v1460 = vadd.f32 %v1439, %v1452
        %v1461 = vadd.f32 %v1440, %v1453
        %v1462 = vadd.f32 %v1441, %v1454
        %v1463 = vadd.f32 %v1442, %v1455
        %v1464 = vadd.f32 %v1443, %v1456
        %v1465 = vadd.f32 %v1444, %v1457
        %v1466 = vld [vmem:[%s498 + $0x6] sm:$0x1]
        %v1467 = vlaneseq
        %v1468 = vshrl.u32 %v1467, 7
        %v1469 = vsub.s32 0, %v1468
        %v1470 = vrot.slane %v1466, %v1469
        %v1471 = vmul.f32 %v1352, %v1470
        %v1472 = vmul.f32 %v1353, %v1470
        %v1473 = vmul.f32 %v1354, %v1470
        %v1474 = vmul.f32 %v1355, %v1470
        %v1475 = vmul.f32 %v1356, %v1470
        %v1476 = vmul.f32 %v1357, %v1470
        %v1477 = vmul.f32 %v1358, %v1470
        %v1478 = vmul.f32 %v1359, %v1470
        %v1479 = vadd.f32 %v1458, %v1471
        %v1480 = vadd.f32 %v1459, %v1472
        %v1481 = vadd.f32 %v1460, %v1473
        %v1482 = vadd.f32 %v1461, %v1474
        %v1483 = vadd.f32 %v1462, %v1475
        %v1484 = vadd.f32 %v1463, %v1476
        %v1485 = vadd.f32 %v1464, %v1477
        %v1486 = vadd.f32 %v1465, %v1478
        %v1487 = vld [vmem:[%s520 + $0x6] sm:$0x1]
        %v1488 = vlaneseq
        %v1489 = vshrl.u32 %v1488, 7
        %v1490 = vsub.s32 0, %v1489
        %v1491 = vrot.slane %v1487, %v1490
        %v1492 = vmul.f32 %v1353, %v1491
        %v1493 = vmul.f32 %v1354, %v1491
        %v1494 = vmul.f32 %v1355, %v1491
        %v1495 = vmul.f32 %v1356, %v1491
        %v1496 = vmul.f32 %v1357, %v1491
        %v1497 = vmul.f32 %v1358, %v1491
        %v1498 = vmul.f32 %v1359, %v1491
        %v1499 = vmul.f32 %v1360, %v1491
        %v1500 = vadd.f32 %v1479, %v1492
        %v1501 = vadd.f32 %v1480, %v1493
        %v1502 = vadd.f32 %v1481, %v1494
        %v1503 = vadd.f32 %v1482, %v1495
        %v1504 = vadd.f32 %v1483, %v1496
        %v1505 = vadd.f32 %v1484, %v1497
        %v1506 = vadd.f32 %v1485, %v1498
        %v1507 = vadd.f32 %v1486, %v1499
        %v1508 = vld [vmem:[%s2] sm:$0x1]
        %v1510 = vlaneseq
        %v1511 = vshrl.u32 %v1510, 7
        %v1512 = vsub.s32 0, %v1511
        %v1513 = vrot.slane %v1508, %v1512
        %v1515 = vadd.f32 %v1500, %v1513
        %v1516 = vadd.f32 %v1501, %v1513
        %v1517 = vadd.f32 %v1502, %v1513
        %v1518 = vadd.f32 %v1503, %v1513
        %v1519 = vadd.f32 %v1504, %v1513
        %v1520 = vadd.f32 %v1505, %v1513
        %v1521 = vadd.f32 %v1506, %v1513
        %v1522 = vadd.f32 %v1507, %v1513
        %s1523 = sadd.s32 %s372, 3
        %s1524 = smul.u32 %s1523, 16
        %s1525 = scalar_lea.vmem %s371, %s1524
        %v1526 = vld [vmem:[%s1525 + $0x3] sm:$0xff]
        %v1527 = vld [vmem:[%s1525 + $0x13] sm:$0xff]
        %v1528 = vld [vmem:[%s1525 + $0x23] sm:$0xff]
        %v1529 = vld [vmem:[%s1525 + $0x33] sm:$0xff]
        %v1530 = vld [vmem:[%s1525 + $0x43] sm:$0xff]
        %v1531 = vld [vmem:[%s1525 + $0x53] sm:$0xff]
        %v1532 = vld [vmem:[%s1525 + $0x63] sm:$0xff]
        %v1533 = vld [vmem:[%s1525 + $0x73] sm:$0xff]
        %vm1534 = vcmask 261120
        %v1535 = vsel %vm1534, %v1515, 0.0
        %1536 = vadd.xlane.f32.xlu0 %v1535
        %v1537 = vpop.xlane.xlu0 %1536
        %v1538 = vsel %vm1534, %v1516, 0.0
        %1539 = vadd.xlane.f32.xlu0 %v1538
        %v1540 = vpop.xlane.xlu0 %1539
        %v1541 = vsel %vm1534, %v1517, 0.0
        %1542 = vadd.xlane.f32.xlu0 %v1541
        %v1543 = vpop.xlane.xlu0 %1542
        %v1544 = vsel %vm1534, %v1518, 0.0
        %1545 = vadd.xlane.f32.xlu0 %v1544
        %v1546 = vpop.xlane.xlu0 %1545
        %v1547 = vsel %vm1534, %v1519, 0.0
        %1548 = vadd.xlane.f32.xlu0 %v1547
        %v1549 = vpop.xlane.xlu0 %1548
        %v1550 = vsel %vm1534, %v1520, 0.0
        %1551 = vadd.xlane.f32.xlu0 %v1550
        %v1552 = vpop.xlane.xlu0 %1551
        %v1553 = vsel %vm1534, %v1521, 0.0
        %1554 = vadd.xlane.f32.xlu0 %v1553
        %v1555 = vpop.xlane.xlu0 %1554
        %v1556 = vsel %vm1534, %v1522, 0.0
        %1557 = vadd.xlane.f32.xlu0 %v1556
        %v1558 = vpop.xlane.xlu0 %1557
        %v1559 = vrcp.pop 32.0
        %v1560 = vmul.f32 %v1537, %v1559
        %v1561 = vmul.f32 %v1540, %v1559
        %v1562 = vmul.f32 %v1543, %v1559
        %v1563 = vmul.f32 %v1546, %v1559
        %v1564 = vmul.f32 %v1549, %v1559
        %v1565 = vmul.f32 %v1552, %v1559
        %v1566 = vmul.f32 %v1555, %v1559
        %v1567 = vmul.f32 %v1558, %v1559
        %v1568 = vsub.f32 %v1515, %v1560
        %v1569 = vsub.f32 %v1516, %v1561
        %v1570 = vsub.f32 %v1517, %v1562
        %v1571 = vsub.f32 %v1518, %v1563
        %v1572 = vsub.f32 %v1519, %v1564
        %v1573 = vsub.f32 %v1520, %v1565
        %v1574 = vsub.f32 %v1521, %v1566
        %v1575 = vsub.f32 %v1522, %v1567
        %v1576 = vmul.f32 %v1568, %v1568
        %v1577 = vmul.f32 %v1569, %v1569
        %v1578 = vmul.f32 %v1570, %v1570
        %v1579 = vmul.f32 %v1571, %v1571
        %v1580 = vmul.f32 %v1572, %v1572
        %v1581 = vmul.f32 %v1573, %v1573
        %v1582 = vmul.f32 %v1574, %v1574
        %v1583 = vmul.f32 %v1575, %v1575
        %v1584 = vsel %vm1534, %v1576, 0.0
        %1585 = vadd.xlane.f32.xlu0 %v1584
        %v1586 = vpop.xlane.xlu0 %1585
        %v1587 = vsel %vm1534, %v1577, 0.0
        %1588 = vadd.xlane.f32.xlu0 %v1587
        %v1589 = vpop.xlane.xlu0 %1588
        %v1590 = vsel %vm1534, %v1578, 0.0
        %1591 = vadd.xlane.f32.xlu0 %v1590
        %v1592 = vpop.xlane.xlu0 %1591
        %v1593 = vsel %vm1534, %v1579, 0.0
        %1594 = vadd.xlane.f32.xlu0 %v1593
        %v1595 = vpop.xlane.xlu0 %1594
        %v1596 = vsel %vm1534, %v1580, 0.0
        %1597 = vadd.xlane.f32.xlu0 %v1596
        %v1598 = vpop.xlane.xlu0 %1597
        %v1599 = vsel %vm1534, %v1581, 0.0
        %1600 = vadd.xlane.f32.xlu0 %v1599
        %v1601 = vpop.xlane.xlu0 %1600
        %v1602 = vsel %vm1534, %v1582, 0.0
        %1603 = vadd.xlane.f32.xlu0 %v1602
        %v1604 = vpop.xlane.xlu0 %1603
        %v1605 = vsel %vm1534, %v1583, 0.0
        %1606 = vadd.xlane.f32.xlu0 %v1605
        %v1607 = vpop.xlane.xlu0 %1606
        %v1608 = vmul.f32 %v1586, %v1559
        %v1609 = vmul.f32 %v1589, %v1559
        %v1610 = vmul.f32 %v1592, %v1559
        %v1611 = vmul.f32 %v1595, %v1559
        %v1612 = vmul.f32 %v1598, %v1559
        %v1613 = vmul.f32 %v1601, %v1559
        %v1614 = vmul.f32 %v1604, %v1559
        %v1615 = vmul.f32 %v1607, %v1559
        %v1616 = vadd.f32 %v1608, 1e-06
        %v1617 = vadd.f32 %v1609, 1e-06
        %v1618 = vadd.f32 %v1610, 1e-06
        %v1619 = vadd.f32 %v1611, 1e-06
        %v1620 = vadd.f32 %v1612, 1e-06
        %v1621 = vadd.f32 %v1613, 1e-06
        %v1622 = vadd.f32 %v1614, 1e-06
        %v1623 = vadd.f32 %v1615, 1e-06
        %v1624 = vrsqrt.pop %v1616
        %v1625 = vrsqrt.pop %v1617
        %v1626 = vrsqrt.pop %v1618
        %v1627 = vrsqrt.pop %v1619
        %v1628 = vrsqrt.pop %v1620
        %v1629 = vrsqrt.pop %v1621
        %v1630 = vrsqrt.pop %v1622
        %v1631 = vrsqrt.pop %v1623
        %v1632 = vmul.f32 %v1568, %v1624
        %v1633 = vmul.f32 %v1569, %v1625
        %v1634 = vmul.f32 %v1570, %v1626
        %v1635 = vmul.f32 %v1571, %v1627
        %v1636 = vmul.f32 %v1572, %v1628
        %v1637 = vmul.f32 %v1573, %v1629
        %v1638 = vmul.f32 %v1574, %v1630
        %v1639 = vmul.f32 %v1575, %v1631
        %v1640 = vld [vmem:[%s3] sm:$0x1]
        %v1642 = vlaneseq
        %v1643 = vshrl.u32 %v1642, 7
        %v1644 = vsub.s32 0, %v1643
        %v1645 = vrot.slane %v1640, %v1644
        %v1647 = vmul.f32 %v1632, %v1645
        %v1648 = vmul.f32 %v1633, %v1645
        %v1649 = vmul.f32 %v1634, %v1645
        %v1650 = vmul.f32 %v1635, %v1645
        %v1651 = vmul.f32 %v1636, %v1645
        %v1652 = vmul.f32 %v1637, %v1645
        %v1653 = vmul.f32 %v1638, %v1645
        %v1654 = vmul.f32 %v1639, %v1645
        %v1655 = vld [vmem:[%s4] sm:$0x1]
        %v1657 = vlaneseq
        %v1658 = vshrl.u32 %v1657, 7
        %v1659 = vsub.s32 0, %v1658
        %v1660 = vrot.slane %v1655, %v1659
        %v1662 = vadd.f32 %v1647, %v1660
        %v1663 = vadd.f32 %v1648, %v1660
        %v1664 = vadd.f32 %v1649, %v1660
        %v1665 = vadd.f32 %v1650, %v1660
        %v1666 = vadd.f32 %v1651, %v1660
        %v1667 = vadd.f32 %v1652, %v1660
        %v1668 = vadd.f32 %v1653, %v1660
        %v1669 = vadd.f32 %v1654, %v1660
        %v1670 = vld [vmem:[%s5] sm:$0xff]
        %v1671 = vld [vmem:[%s5 + $0x8] sm:$0xff]
        %v1672 = vld [vmem:[%s5 + $0x10] sm:$0xff]
        %v1673 = vld [vmem:[%s5 + $0x18] sm:$0xff]
        %v1674 = vld [vmem:[%s6] sm:$0x1]
        %v1676 = vlaneseq
        %v1677 = vshrl.u32 %v1676, 7
        %v1678 = vsub.s32 0, %v1677
        %v1679 = vrot.slane %v1674, %v1678
        %v1682 = vsel %vm1534, %v1662, 0
        %v1685 = vsel %vm1534, %v1663, 0
        %v1688 = vsel %vm1534, %v1664, 0
        %v1691 = vsel %vm1534, %v1665, 0
        %v1694 = vsel %vm1534, %v1666, 0
        %v1697 = vsel %vm1534, %v1667, 0
        %v1700 = vsel %vm1534, %v1668, 0
        %v1703 = vsel %vm1534, %v1669, 0
        %1705 = vmatprep.subr.mxu0 0.0
        %1706 = vmatpush1.msra.mxu0 %v1670
        %1707 = vmatprep.subr.mxu0 0.0
        %1708 = vmatpush1.msra.mxu0 %v1671
        %1709 = vmatprep.subr.mxu0 0.0
        %1710 = vmatpush1.msra.mxu0 %v1672
        %1711 = vmatprep.subr.mxu0 0.0
        %1712 = vmatpush1.msra.mxu0 %v1673
        %1713 = vmatprep.subr.mxu0 0.0
        %1714 = vmatpush1.msra.mxu0 0.0
        %1715 = vmatprep.subr.mxu0 0.0
        %1716 = vmatpush1.msra.mxu0 0.0
        %1717 = vmatprep.subr.mxu0 0.0
        %1718 = vmatpush1.msra.mxu0 0.0
        %1719 = vmatprep.subr.mxu0 0.0
        %1720 = vmatpush1.msra.mxu0 0.0
        %1721 = vmatprep.subr.mxu0 0.0
        %1722 = vmatpush1.msra.mxu0 0.0
        %1723 = vmatprep.subr.mxu0 0.0
        %1724 = vmatpush1.msra.mxu0 0.0
        %1725 = vmatprep.subr.mxu0 0.0
        %1726 = vmatpush1.msra.mxu0 0.0
        %1727 = vmatprep.subr.mxu0 0.0
        %1728 = vmatpush1.msra.mxu0 0.0
        %1729 = vmatprep.subr.mxu0 0.0
        %1730 = vmatpush1.msra.mxu0 0.0
        %1731 = vmatprep.subr.mxu0 0.0
        %1732 = vmatpush1.msra.mxu0 0.0
        %1733 = vmatprep.subr.mxu0 0.0
        %1734 = vmatpush1.msra.mxu0 0.0
        %1735 = vmatprep.subr.mxu0 0.0
        %1736 = vmatpush1.msra.mxu0 0.0
        %1737 = vmatprep.subr.mxu0 0.0
        %1738 = vmatpush1.msra.mxu0 0.0
        %1739 = vmatprep.subr.mxu0 0.0
        %1740 = vmatpush1.msra.mxu0 0.0
        %1741 = vmatprep.subr.mxu0 0.0
        %1742 = vmatpush1.msra.mxu0 0.0
        %1743 = vmatprep.subr.mxu0 0.0
        %1744 = vmatpush1.msra.mxu0 0.0
        %1745 = vmatprep.subr.mxu0 0.0
        %1746 = vmatpush1.msra.mxu0 0.0
        %1747 = vmatprep.subr.mxu0 0.0
        %1748 = vmatpush1.msra.mxu0 0.0
        %1749 = vmatprep.subr.mxu0 0.0
        %1750 = vmatpush1.msra.mxu0 0.0
        %1751 = vmatprep.subr.mxu0 0.0
        %1752 = vmatpush1.msra.mxu0 0.0
        %1753 = vmatprep.subr.mxu0 0.0
        %1754 = vmatpush1.msra.mxu0 0.0
        %1755 = vmatprep.subr.mxu0 0.0
        %1756 = vmatpush1.msra.mxu0 0.0
        %1757 = vmatprep.subr.mxu0 0.0
        %1758 = vmatpush1.msra.mxu0 0.0
        %1759 = vmatprep.subr.mxu0 0.0
        %1760 = vmatpush1.msra.mxu0 0.0
        %1761 = vmatprep.subr.mxu0 0.0
        %1762 = vmatpush1.msra.mxu0 0.0
        %1763 = vmatprep.subr.mxu0 0.0
        %1764 = vmatpush1.msra.mxu0 0.0
        %1765 = vmatprep.subr.mxu0 0.0
        %1766 = vmatpush1.msra.mxu0 0.0
        %1767 = vmatprep.subr.mxu0 0.0
        %1768 = vmatpush1.msra.mxu0 0.0
        %1769 = vmatprep.mubr.f32.mxu0 0.0
        %1770 = vmatmul.mubr.f32.gmra.mrb[0].mxu0 %v1682
        %v1771 = vpop.f32.mrb[0].mxu0
        %v1772 = vadd.f32 %v1679, %v1771
        %v1773 = vpop.f32.mrb[0].mxu0
        %1774 = vmatprep.mubr.f32.mxu0 0.0
        %1775 = vmatmul.mubr.f32.gmra.mrb[0].mxu0 %v1685
        %v1776 = vpop.f32.mrb[0].mxu0
        %v1777 = vadd.f32 %v1679, %v1776
        %v1778 = vpop.f32.mrb[0].mxu0
        %1779 = vmatprep.mubr.f32.mxu0 0.0
        %1780 = vmatmul.mubr.f32.gmra.mrb[0].mxu0 %v1688
        %v1781 = vpop.f32.mrb[0].mxu0
        %v1782 = vadd.f32 %v1679, %v1781
        %v1783 = vpop.f32.mrb[0].mxu0
        %1784 = vmatprep.mubr.f32.mxu0 0.0
        %1785 = vmatmul.mubr.f32.gmra.mrb[0].mxu0 %v1691
        %v1786 = vpop.f32.mrb[0].mxu0
        %v1787 = vadd.f32 %v1679, %v1786
        %v1788 = vpop.f32.mrb[0].mxu0
        %1789 = vmatprep.mubr.f32.mxu0 0.0
        %1790 = vmatmul.mubr.f32.gmra.mrb[0].mxu0 %v1694
        %v1791 = vpop.f32.mrb[0].mxu0
        %v1792 = vadd.f32 %v1679, %v1791
        %v1793 = vpop.f32.mrb[0].mxu0
        %1794 = vmatprep.mubr.f32.mxu0 0.0
        %1795 = vmatmul.mubr.f32.gmra.mrb[0].mxu0 %v1697
        %v1796 = vpop.f32.mrb[0].mxu0
        %v1797 = vadd.f32 %v1679, %v1796
        %v1798 = vpop.f32.mrb[0].mxu0
        %1799 = vmatprep.mubr.f32.mxu0 0.0
        %1800 = vmatmul.mubr.f32.gmra.mrb[0].mxu0 %v1700
        %v1801 = vpop.f32.mrb[0].mxu0
        %v1802 = vadd.f32 %v1679, %v1801
        %v1803 = vpop.f32.mrb[0].mxu0
        %1804 = vmatprep.mubr.f32.mxu0 0.0
        %1805 = vmatmul.mubr.f32.gmra.mrb[0].mxu0 %v1703
        %v1806 = vpop.f32.mrb[0].mxu0
        %v1807 = vadd.f32 %v1679, %v1806
        %v1808 = vpop.f32.mrb[0].mxu0
        %1809 = vdwg.mxu0
        %v1810 = vmul.f32 %v1772, 0.5
        %v1811 = vmul.f32 %v1777, 0.5
        %v1812 = vmul.f32 %v1782, 0.5
        %v1813 = vmul.f32 %v1787, 0.5
        %v1814 = vmul.f32 %v1792, 0.5
        %v1815 = vmul.f32 %v1797, 0.5
        %v1816 = vmul.f32 %v1802, 0.5
        %v1817 = vmul.f32 %v1807, 0.5
        %v1818 = vmul.f32 %v1772, 0.70710677
        %v1819 = vmul.f32 %v1777, 0.70710677
        %v1820 = vmul.f32 %v1782, 0.70710677
        %v1821 = vmul.f32 %v1787, 0.70710677
        %v1822 = vmul.f32 %v1792, 0.70710677
        %v1823 = vmul.f32 %v1797, 0.70710677
        %v1824 = vmul.f32 %v1802, 0.70710677
        %v1825 = vmul.f32 %v1807, 0.70710677
        %v1826 = verf.f32.pop %v1818
        %v1827 = verf.f32.pop %v1819
        %v1828 = verf.f32.pop %v1820
        %v1829 = verf.f32.pop %v1821
        %v1830 = verf.f32.pop %v1822
        %v1831 = verf.f32.pop %v1823
        %v1832 = verf.f32.pop %v1824
        %v1833 = verf.f32.pop %v1825
        %v1834 = vadd.f32 %v1826, 1.0
        %v1835 = vadd.f32 %v1827, 1.0
        %v1836 = vadd.f32 %v1828, 1.0
        %v1837 = vadd.f32 %v1829, 1.0
        %v1838 = vadd.f32 %v1830, 1.0
        %v1839 = vadd.f32 %v1831, 1.0
        %v1840 = vadd.f32 %v1832, 1.0
        %v1841 = vadd.f32 %v1833, 1.0
        %v1842 = vmul.f32 %v1810, %v1834
        %v1843 = vmul.f32 %v1811, %v1835
        %v1844 = vmul.f32 %v1812, %v1836
        %v1845 = vmul.f32 %v1813, %v1837
        %v1846 = vmul.f32 %v1814, %v1838
        %v1847 = vmul.f32 %v1815, %v1839
        %v1848 = vmul.f32 %v1816, %v1840
        %v1849 = vmul.f32 %v1817, %v1841
        %v1850 = vld [vmem:[%s7] sm:$0xff]
        %v1851 = vld [vmem:[%s7 + $0x8] sm:$0xff]
        %v1852 = vld [vmem:[%s7 + $0x10] sm:$0xff]
        %v1853 = vld [vmem:[%s7 + $0x18] sm:$0xff]
        %v1854 = vld [vmem:[%s7 + $0x20] sm:$0xff]
        %v1855 = vld [vmem:[%s7 + $0x28] sm:$0xff]
        %v1856 = vld [vmem:[%s7 + $0x30] sm:$0xff]
        %v1857 = vld [vmem:[%s7 + $0x38] sm:$0xff]
        %v1858 = vld [vmem:[%s7 + $0x40] sm:$0xff]
        %v1859 = vld [vmem:[%s7 + $0x48] sm:$0xff]
        %v1860 = vld [vmem:[%s7 + $0x50] sm:$0xff]
        %v1861 = vld [vmem:[%s7 + $0x58] sm:$0xff]
        %v1862 = vld [vmem:[%s7 + $0x60] sm:$0xff]
        %v1863 = vld [vmem:[%s7 + $0x68] sm:$0xff]
        %v1864 = vld [vmem:[%s7 + $0x70] sm:$0xff]
        %v1865 = vld [vmem:[%s7 + $0x78] sm:$0xff]
        %v1866 = vld [vmem:[%s8] sm:$0x1]
        %v1868 = vlaneseq
        %v1869 = vshrl.u32 %v1868, 7
        %v1870 = vsub.s32 0, %v1869
        %v1871 = vrot.slane %v1866, %v1870
        %1873 = vmatprep.subr.mxu0 0.0
        %1874 = vmatpush1.msra.mxu0 %v1850
        %1875 = vmatprep.subr.mxu0 0.0
        %1876 = vmatpush1.msra.mxu0 %v1851
        %1877 = vmatprep.subr.mxu0 0.0
        %1878 = vmatpush1.msra.mxu0 %v1852
        %1879 = vmatprep.subr.mxu0 0.0
        %1880 = vmatpush1.msra.mxu0 %v1853
        %1881 = vmatprep.subr.mxu0 0.0
        %1882 = vmatpush1.msra.mxu0 %v1854
        %1883 = vmatprep.subr.mxu0 0.0
        %1884 = vmatpush1.msra.mxu0 %v1855
        %1885 = vmatprep.subr.mxu0 0.0
        %1886 = vmatpush1.msra.mxu0 %v1856
        %1887 = vmatprep.subr.mxu0 0.0
        %1888 = vmatpush1.msra.mxu0 %v1857
        %1889 = vmatprep.subr.mxu0 0.0
        %1890 = vmatpush1.msra.mxu0 %v1858
        %1891 = vmatprep.subr.mxu0 0.0
        %1892 = vmatpush1.msra.mxu0 %v1859
        %1893 = vmatprep.subr.mxu0 0.0
        %1894 = vmatpush1.msra.mxu0 %v1860
        %1895 = vmatprep.subr.mxu0 0.0
        %1896 = vmatpush1.msra.mxu0 %v1861
        %1897 = vmatprep.subr.mxu0 0.0
        %1898 = vmatpush1.msra.mxu0 %v1862
        %1899 = vmatprep.subr.mxu0 0.0
        %1900 = vmatpush1.msra.mxu0 %v1863
        %1901 = vmatprep.subr.mxu0 0.0
        %1902 = vmatpush1.msra.mxu0 %v1864
        %1903 = vmatprep.subr.mxu0 0.0
        %1904 = vmatpush1.msra.mxu0 %v1865
        %1905 = vmatprep.subr.mxu0 0.0
        %1906 = vmatpush1.msra.mxu0 0.0
        %1907 = vmatprep.subr.mxu0 0.0
        %1908 = vmatpush1.msra.mxu0 0.0
        %1909 = vmatprep.subr.mxu0 0.0
        %1910 = vmatpush1.msra.mxu0 0.0
        %1911 = vmatprep.subr.mxu0 0.0
        %1912 = vmatpush1.msra.mxu0 0.0
        %1913 = vmatprep.subr.mxu0 0.0
        %1914 = vmatpush1.msra.mxu0 0.0
        %1915 = vmatprep.subr.mxu0 0.0
        %1916 = vmatpush1.msra.mxu0 0.0
        %1917 = vmatprep.subr.mxu0 0.0
        %1918 = vmatpush1.msra.mxu0 0.0
        %1919 = vmatprep.subr.mxu0 0.0
        %1920 = vmatpush1.msra.mxu0 0.0
        %1921 = vmatprep.subr.mxu0 0.0
        %1922 = vmatpush1.msra.mxu0 0.0
        %1923 = vmatprep.subr.mxu0 0.0
        %1924 = vmatpush1.msra.mxu0 0.0
        %1925 = vmatprep.subr.mxu0 0.0
        %1926 = vmatpush1.msra.mxu0 0.0
        %1927 = vmatprep.subr.mxu0 0.0
        %1928 = vmatpush1.msra.mxu0 0.0
        %1929 = vmatprep.subr.mxu0 0.0
        %1930 = vmatpush1.msra.mxu0 0.0
        %1931 = vmatprep.subr.mxu0 0.0
        %1932 = vmatpush1.msra.mxu0 0.0
        %1933 = vmatprep.subr.mxu0 0.0
        %1934 = vmatpush1.msra.mxu0 0.0
        %1935 = vmatprep.subr.mxu0 0.0
        %1936 = vmatpush1.msra.mxu0 0.0
        %1937 = vmatprep.mubr.f32.mxu0 0.0
        %1938 = vmatmul.mubr.f32.gmra.mrb[0].mxu0 %v1842
        %v1939 = vpop.f32.mrb[0].mxu0
        %v1940 = vadd.f32 %v1871, %v1939
        %v1941 = vpop.f32.mrb[0].mxu0
        %1942 = vmatprep.mubr.f32.mxu0 0.0
        %1943 = vmatmul.mubr.f32.gmra.mrb[0].mxu0 %v1843
        %v1944 = vpop.f32.mrb[0].mxu0
        %v1945 = vadd.f32 %v1871, %v1944
        %v1946 = vpop.f32.mrb[0].mxu0
        %1947 = vmatprep.mubr.f32.mxu0 0.0
        %1948 = vmatmul.mubr.f32.gmra.mrb[0].mxu0 %v1844
        %v1949 = vpop.f32.mrb[0].mxu0
        %v1950 = vadd.f32 %v1871, %v1949
        %v1951 = vpop.f32.mrb[0].mxu0
        %1952 = vmatprep.mubr.f32.mxu0 0.0
        %1953 = vmatmul.mubr.f32.gmra.mrb[0].mxu0 %v1845
        %v1954 = vpop.f32.mrb[0].mxu0
        %v1955 = vadd.f32 %v1871, %v1954
        %v1956 = vpop.f32.mrb[0].mxu0
        %1957 = vmatprep.mubr.f32.mxu0 0.0
        %1958 = vmatmul.mubr.f32.gmra.mrb[0].mxu0 %v1846
        %v1959 = vpop.f32.mrb[0].mxu0
        %v1960 = vadd.f32 %v1871, %v1959
        %v1961 = vpop.f32.mrb[0].mxu0
        %1962 = vmatprep.mubr.f32.mxu0 0.0
        %1963 = vmatmul.mubr.f32.gmra.mrb[0].mxu0 %v1847
        %v1964 = vpop.f32.mrb[0].mxu0
        %v1965 = vadd.f32 %v1871, %v1964
        %v1966 = vpop.f32.mrb[0].mxu0
        %1967 = vmatprep.mubr.f32.mxu0 0.0
        %1968 = vmatmul.mubr.f32.gmra.mrb[0].mxu0 %v1848
        %v1969 = vpop.f32.mrb[0].mxu0
        %v1970 = vadd.f32 %v1871, %v1969
        %v1971 = vpop.f32.mrb[0].mxu0
        %1972 = vmatprep.mubr.f32.mxu0 0.0
        %1973 = vmatmul.mubr.f32.gmra.mrb[0].mxu0 %v1849
        %v1974 = vpop.f32.mrb[0].mxu0
        %v1975 = vadd.f32 %v1871, %v1974
        %v1976 = vpop.f32.mrb[0].mxu0
        %1977 = vdwg.mxu0
        %v1978 = vld [vmem:[%s9] sm:$0x1]
        %v1980 = vlaneseq
        %v1981 = vshrl.u32 %v1980, 7
        %v1982 = vsub.s32 0, %v1981
        %v1983 = vrot.slane %v1978, %v1982
        %v1985 = vmul.f32 %v1940, %v1983
        %v1986 = vmul.f32 %v1945, %v1983
        %v1987 = vmul.f32 %v1950, %v1983
        %v1988 = vmul.f32 %v1955, %v1983
        %v1989 = vmul.f32 %v1960, %v1983
        %v1990 = vmul.f32 %v1965, %v1983
        %v1991 = vmul.f32 %v1970, %v1983
        %v1992 = vmul.f32 %v1975, %v1983
        %v1993 = vadd.f32 %v1526, %v1985
        %v1994 = vadd.f32 %v1527, %v1986
        %v1995 = vadd.f32 %v1528, %v1987
        %v1996 = vadd.f32 %v1529, %v1988
        %v1997 = vadd.f32 %v1530, %v1989
        %v1998 = vadd.f32 %v1531, %v1990
        %v1999 = vadd.f32 %v1532, %v1991
        %v2000 = vadd.f32 %v1533, %v1992
        %2001 = vxpose.xlu0.b32.start [1/16] %v1993, 128
        %2002 = vxpose.xlu0.b32.cont [2/16] %v1994, 128
        %2003 = vxpose.xlu0.b32.cont [3/16] %v1995, 128
        %2004 = vxpose.xlu0.b32.cont [4/16] %v1996, 128
        %2005 = vxpose.xlu0.b32.cont [5/16] %v1997, 128
        %2006 = vxpose.xlu0.b32.cont [6/16] %v1998, 128
        %2007 = vxpose.xlu0.b32.cont [7/16] %v1999, 128
        %2008 = vxpose.xlu0.b32.cont [8/16] %v2000, 128
        %2009 = vxpose.xlu0.b32.cont [9/16] 0.0, 128
        %2010 = vxpose.xlu0.b32.cont [10/16] 0.0, 128
        %2011 = vxpose.xlu0.b32.cont [11/16] 0.0, 128
        %2012 = vxpose.xlu0.b32.cont [12/16] 0.0, 128
        %2013 = vxpose.xlu0.b32.cont [13/16] 0.0, 128
        %2014 = vxpose.xlu0.b32.cont [14/16] 0.0, 128
        %2015 = vxpose.xlu0.b32.cont [15/16] 0.0, 128
        %2016 = vxpose.xlu0.b32.end [16/16] 0.0, 128
        %v2017 = vpop.trf.xlu0
        %v2018 = vpop.trf.xlu0
        %v2019 = vpop.trf.xlu0
        %v2020 = vpop.trf.xlu0
        %v2021 = vpop.trf.xlu0
        %v2022 = vpop.trf.xlu0
        %v2023 = vpop.trf.xlu0
        %v2024 = vpop.trf.xlu0
        %v2025 = vpop.trf.xlu0
        %v2026 = vpop.trf.xlu0
        %v2027 = vpop.trf.xlu0
        %v2028 = vpop.trf.xlu0
        %v2029 = vpop.trf.xlu0
        %v2030 = vpop.trf.xlu0
        %v2031 = vpop.trf.xlu0
        %v2032 = vpop.trf.xlu0
        %vm2033 = vcmask 523264
        %2034 = vst.msk [vmem:[%s366] sm:$0xff] %vm2033, %v2017
        %2035 = vst.msk [vmem:[%s366 + $0x8] sm:$0xff] %vm2033, %v2018
        %2036 = vst.msk [vmem:[%s366 + $0x10] sm:$0xff] %vm2033, %v2019
        %2037 = vst.msk [vmem:[%s366 + $0x18] sm:$0xff] %vm2033, %v2020
        %s2038 = sand.u32 %s261, 1
        %s2039 = scalar_lea.sflag [#allocation3], %s2038
        %s2040 = sand.u32 %s261, 1
        %s2041 = smul.addr %s2040, 32
        %s2042 = scalar_lea.vmem [#allocation2], %s2041
        // Predicated region
        $region61: #{tpu_custom_call.1} parent=59 // pred_check
          %p2043 = pneg %p271
        $region62: #{tpu_custom_call.1} parent=59 // pred_check_branch
          %2045 = sbr.rel (%p2043) target = $region64
        $region63: #{tpu_custom_call.1} parent=59 // pred_region
          %s2047 = ssub.s32 512, 512
          %2048 = vsyncadd %s2039, %s2047
          %s2049 = smul.addr %s28, 4
          %s2050 = sadd.s32 %s29, %s2049
          %s2051 = smul.addr %s2050, 128
          %s2052 = scalar_lea.hbm %s10, %s2051
          %s2053 = sshll.u32 %s2042, 4
          %s2054 = int_to_ptr.vmem [resolvable:$true] %s2053
          %2059 = dma.vmem_to_hbm [thread:$0]  %s2054, 512, %s2052, %s2039, 128, 128, 8
        $region64: #{tpu_custom_call.1} parent=59 // pred_fallthru
          _
      $region60: #{tpu_custom_call.1} parent=5 // pred_fallthru
        _
      %p2060 = scmp.le.s32.totalorder 2, %s19
      // Predicated region
      $region65: #{tpu_custom_call.1} parent=5 // pred_check
        %p2061 = pneg %p2060
      $region66: #{tpu_custom_call.1} parent=5 // pred_check_branch
        %2063 = sbr.rel (%p2061) target = $region68
      $region67: #{tpu_custom_call.1} parent=5 // pred_region
        %s2064 = ssub.s32 %s19, 2
        // Predicated region
        $region69: #{tpu_custom_call.1} parent=67 // pred_check
          %p2065 = pneg %p277
        $region70: #{tpu_custom_call.1} parent=67 // pred_check_branch
          %2067 = sbr.rel (%p2065) target = $region72
        $region71: #{tpu_custom_call.1} parent=67 // pred_region
          %s2068 = sand.u32 %s262, 1
          %s2069 = scalar_lea.sflag [#allocation3], %s2068
          %s2070 = sand.u32 %s262, 1
          %s2071 = smul.addr %s2070, 32
          %s2072 = scalar_lea.vmem [#allocation2], %s2071
          %2073 = dma.done %s2069, 512
        $region72: #{tpu_custom_call.1} parent=67 // pred_fallthru
          _
      $region68: #{tpu_custom_call.1} parent=5 // pred_fallthru
        _
    $region6: #{tpu_custom_call.1} parent=1 // loop_footer
      %s23 = sadd.s32 1, %s19
    $region7: #{tpu_custom_call.1} parent=1 // loop_footer_branch
      %18 = sbr.rel target = $region3
    $region8: #{tpu_custom_call.1} parent=1 // loop_exit
      _
    %2074 = vsyncpa [#allocation3], 1
    %s2075 = scalar_lea.sflag [#allocation3], 1
    %2076 = vsyncpa %s2075, 1

</llo_original>
